<compile_context>
chip_gen: v7x
topology: tpu7x:2x2x1
jax: 0.10.0
libtpu: 0.0.40
codegen_flags: <defaults>
</compile_context>

<pallas_src>
import functools
import numpy as np
import jax
import jax.numpy as jnp
from jax.experimental import pallas as pl
from jax.experimental.pallas import tpu as pltpu

NUM_BODY_BONES = 8
NUM_LEG_BONES = 3
NUM_LEGS = 4
NUM_BONES = NUM_BODY_BONES + NUM_LEG_BONES * NUM_LEGS   # 20 (fixed by the module)
MAX_ARTI_ANGLE = 60.0
REG_BODY_ROTATE_MULT = 0.1
TEMPERATURE = 0.05       # skinning temperature used in module.forward
IMAGE_SIZE = 256.0       # module default
FOCAL = 2.0              # TODO(synk): real camera intrinsics come from get_renderer(); unknown here
MAX_TILE = 4096          # lane-dense vertex tile upper bound

_INV_T2 = (1.0 / TEMPERATURE) ** 2
_EPS = 1e-8 * _INV_T2


def _use_bf16():
    # bf16 exp / MXU operands only where the EUP/MXU are bf16-native (v6e, v7x, ...).
    try:
        kind = jax.devices()[0].device_kind.lower()
    except Exception:
        return False
    return not any(t in kind for t in ("v2", "v3", "v4", "v5"))


_USE_BF16 = _use_bf16()


# ---------------------------------------------------------------------------
# Single kernel: soft skinning weights + precomposed (skin ∘ global) transform
# + pinhole projection.
#   w[b,n]   = softmax_b( -|v_n - mid_b| / T )
#   world    = sum_b w[b,n] * ( (Rg diag(s) R_b) v_n + Rg diag(s)(h_b - R_b h_b) + t )
#   screen   = pinhole projection of world
# v_ref rows: x, y, z, ones.  midc_ref cols: -2*mid/T^2 (3), |mid|^2/T^2 (1).
# rc_ref rows 0..8: composed rotations in j-major order (row 3*j+k = M[b,k,j]),
# rows 9..11: composed offsets (global translation folded in), row 12: ones
# (gives the softmax denominator from the same contraction).
# ---------------------------------------------------------------------------
def _deform_kernel(v_ref, rc_ref, midc_ref, out_ref, *, compute_dtype):
    v = v_ref[...]                                                         # (4, TN)

    # |v|^2 / T^2 via explicit row math (VPU), no cross-sublane XLU reduce
    v2 = (v[0:1] * v[0:1] + v[1:2] * v[1:2] + v[2:3] * v[2:3]) * _INV_T2   # (1, TN)

    # (-2 mid.v + |mid|^2)/T^2 in one tiny MXU dot; |mid|^2 precomputed host-side
    # and picked up by the ones row of v. Kept f32 (distance -> softmax is the
    # numerically sensitive path).
    cross = jnp.dot(midc_ref[...], v, preferred_element_type=jnp.float32)  # (B, TN)

    d2 = jnp.maximum(cross + v2, 0.0)
    logits = -jnp.sqrt(d2 + _EPS)                                          # (B, TN)
    shifted = logits - jnp.max(logits, axis=0, keepdims=True)

    # Unnormalized skinning weights; bf16 exp on v6e/v7x (EUP is the floor there).
    w = jnp.exp(shifted.astype(compute_dtype))                             # (B, TN)

    # One contraction for all rotation columns, offsets and the softmax denominator.
    e = jnp.dot(rc_ref[...].astype(compute_dtype), w,
                preferred_element_type=jnp.float32)                        # (13, TN)

    # Rotation apply as 3 broadcast FMAs on (3,TN) slabs (j-major rc ordering),
    # then one exact normalization of the whole slab.
    vx, vy, vz = v[0:1], v[1:2], v[2:3]
    num = e[0:3] * vx + e[3:6] * vy + e[6:9] * vz + e[9:12]                # (3, TN)
    inv_den = pl.reciprocal(e[12:13], approx=False)   # exact: weights sum to exactly 1
    world = num * inv_den                                                  # (3, TN)
    out_ref[0:3, :] = world                                                # one slab store

    # Pinhole projection on a 2-row slab (stand-in for cameras.transform_points_screen);
    # sign-safe depth to avoid blow-up at z ~ 0.
    wz = world[2:3]
    z_safe = jnp.where(wz >= 0.0, jnp.maximum(wz, 1e-6), jnp.minimum(wz, -1e-6))
    inv_z = pl.reciprocal(z_safe, approx=True)
    out_ref[3:5, :] = world[0:2] * (inv_z * (FOCAL * 0.5 * IMAGE_SIZE)) + 0.5 * IMAGE_SIZE


# ---------------------------------------------------------------------------
# Host-side glue (plain JAX, fuses under jit): articulation restriction,
# euler -> rotation matrices, precomposition of global transform, kernel call.
# ---------------------------------------------------------------------------
def _build_restriction_factor():
    # Folds every multiplicative mask of get_restricted_articulation_parameters
    # into a single per-element scale applied to tanh(arti).
    factor = np.ones((NUM_BONES, 3), np.float32)
    half = NUM_LEG_BONES * NUM_LEGS // 2
    leg_posx = [NUM_BODY_BONES + i for i in range(half)]
    leg_negx = [NUM_BODY_BONES + half + i for i in range(half)]
    legs = leg_posx + leg_negx
    factor[legs, 2] *= 0.3
    factor[legs, 1] *= 0.3
    leg_top = [8, 11, 14, 17]
    factor[leg_top, 1] *= 0.05
    factor[leg_top, 2] *= 0.05
    leg_bottom = [9, 10, 12, 13, 15, 16, 18, 19]
    factor[leg_bottom, 1] = 0.0
    factor[leg_bottom, 2] = 0.0
    factor *= MAX_ARTI_ANGLE / 180.0 * np.pi
    body_rotate_mult = REG_BODY_ROTATE_MULT * 180.0 / (MAX_ARTI_ANGLE * np.pi)
    factor[list(range(NUM_BODY_BONES)), 2] *= body_rotate_mult
    return factor


def euler_to_matrix(angles):
    """angles (..., 3) -> rotation matrices (..., 3, 3); R = Rz @ Ry @ Rx."""
    rx, ry, rz = angles[..., 0], angles[..., 1], angles[..., 2]
    cx, sx = jnp.cos(rx), jnp.sin(rx)
    cy, sy = jnp.cos(ry), jnp.sin(ry)
    cz, sz = jnp.cos(rz), jnp.sin(rz)
    one, zero = jnp.ones_like(rx), jnp.zeros_like(rx)
    shp = angles.shape[:-1] + (3, 3)
    Rx = jnp.stack([one, zero, zero, zero, cx, -sx, zero, sx, cx], -1).reshape(shp)
    Ry = jnp.stack([cy, zero, sy, zero, one, zero, -sy, zero, cy], -1).reshape(shp)
    Rz = jnp.stack([cz, -sz, zero, sz, cz, zero, zero, zero, one], -1).reshape(shp)
    return Rz @ Ry @ Rx


def _choose_tile(n):
    """Lane-aligned tile; big enough to amortize ~0.35us/step, but keeps >= 2
    grid steps when possible so v7x megacore can shard the parallel axis."""
    n128 = -(-n // 128) * 128
    if n128 <= 256:
        tile = n128
    else:
        half = -(-(n128 // 2) // 128) * 128
        tile = min(MAX_TILE, half)
    n_pad = -(-n128 // tile) * tile
    return tile, n_pad


def deform_forward(verts, arti_params, rotation_params, translation_params,
                   scale_params, bone_heads, bone_tails):
    n = verts.shape[0]
    tile, n_pad = _choose_tile(n)
    grid = n_pad // tile
    compute_dtype = jnp.bfloat16 if _USE_BF16 else jnp.float32

    # articulation restriction (tiny; fused by XLA, no pallas_call)
    factor = jnp.asarray(_build_restriction_factor())
    arti = jnp.tanh(arti_params.astype(jnp.float32)) * factor              # (B, 3)

    # TODO(synk): exact `estimate_bones()` / `skinning()` kinematic-chain composition is
    # external; per-bone rotations are applied about each bone head without the parent chain.
    bone_rot = euler_to_matrix(arti)                                        # (B, 3, 3)
    heads = bone_heads.astype(jnp.float32)                                  # (B, 3)
    mids = 0.5 * (bone_heads + bone_tails).astype(jnp.float32)              # (B, 3)

    # TODO(synk): get_transform_function is external; using scale->rotate->translate.
    g_rot = euler_to_matrix(rotation_params.astype(jnp.float32))            # (3, 3)
    g_scale = scale_params.astype(jnp.float32)                              # (3,)
    g_trans = translation_params.astype(jnp.float32)                        # (3,)

    # Precompose global similarity with the per-bone skinning terms (translation folds
    # into the offsets because the softmax weights sum to 1); add a ones row so the
    # softmax denominator falls out of the same MXU contraction.
    A = g_rot * g_scale[None, :]                                            # Rg @ diag(s)
    M = jnp.einsum('ij,bjk->bik', A, bone_rot)                              # (B, 3, 3)
    rflat = jnp.transpose(M, (2, 1, 0)).reshape(9, NUM_BONES)               # row 3*j+k = M[b,k,j]
    off = heads - jnp.einsum('bkj,bj->bk', bone_rot, heads)                 # h_b - R_b h_b
    c = jnp.transpose(off @ A.T + g_trans[None, :])                         # (3, B)
    ones_row = jnp.ones((1, NUM_BONES), jnp.float32)
    rc = jnp.concatenate([rflat, c, ones_row], axis=0)                      # (13, B)

    # Bone-midpoint constants with |mid|^2 precomputed host-side (folded into the
    # cross-term dot via the ones row of the vertex slab); 1/T^2 pre-applied.
    m2 = jnp.sum(mids * mids, axis=1, keepdims=True)                        # (B, 1)
    midc = jnp.concatenate([-2.0 * mids * _INV_T2, m2 * _INV_T2], axis=1)   # (B, 4)

    # channels-first vertex slab with a ones row; zero-pad the lane axis to the tile
    v_aug = jnp.concatenate([jnp.transpose(verts.astype(jnp.float32)),
                             jnp.ones((1, n), jnp.float32)], axis=0)        # (4, N)
    if n_pad != n:
        v_aug = jnp.pad(v_aug, ((0, 0), (0, n_pad - n)))

    kernel = functools.partial(_deform_kernel, compute_dtype=compute_dtype)
    out = pl.pallas_call(
        kernel,
        out_shape=jax.ShapeDtypeStruct((5, n_pad), jnp.float32),
        grid=(grid,),
        in_specs=[
            pl.BlockSpec((4, tile), lambda i: (0, i)),
            pl.BlockSpec((13, NUM_BONES), lambda i: (0, 0)),    # constant block, stays resident
            pl.BlockSpec((NUM_BONES, 4), lambda i: (0, 0)),     # constant block, stays resident
        ],
        out_specs=pl.BlockSpec((5, tile), lambda i: (0, i)),    # merged world(3)+screen(2) output
        compiler_params=pltpu.CompilerParams(dimension_semantics=("parallel",)),
    )(v_aug, rc, midc)

    deformed_verts = jnp.transpose(out[0:3, :n])    # (N, 3)
    image_verts_2d = jnp.transpose(out[3:5, :n])    # (N, 2), matches module's [:, :2] output
    # TODO(synk): pytorch3d Meshes/TexturesAtlas/MeshRenderer have no Pallas equivalent;
    # the rendered `images` output is not reproduced — the deformed vertices are returned.
    return deformed_verts, image_verts_2d


if __name__ == "__main__":
    key = jax.random.PRNGKey(0)
    k_v, k_a, k_r, k_t, k_s, k_bh, k_bt = jax.random.split(key, 7)

    num_verts = 2500   # not a multiple of 128/tile -> exercises pad/slice path; grid has 2 steps
    verts = jax.random.normal(k_v, (num_verts, 3), jnp.float32)
    # module inits arti_params to zeros; use small random values to exercise the kernel
    arti_params = 0.5 * jax.random.normal(k_a, (NUM_BONES, 3), jnp.float32)
    rotation_params = 0.1 * jax.random.normal(k_r, (3,), jnp.float32)
    translation_params = jax.random.normal(k_t, (3,), jnp.float32)
    scale_params = jnp.ones((3,), jnp.float32) + 0.05 * jax.random.normal(k_s, (3,), jnp.float32)
    bone_heads = jax.random.normal(k_bh, (NUM_BONES, 3), jnp.float32)
    bone_tails = bone_heads + 0.3 * jax.random.normal(k_bt, (NUM_BONES, 3), jnp.float32)

    deformed_verts, image_verts_2d = jax.jit(deform_forward)(
        verts, arti_params, rotation_params, translation_params,
        scale_params, bone_heads, bone_tails)
    jax.block_until_ready((deformed_verts, image_verts_2d))
    assert deformed_verts.shape == (num_verts, 3)
    assert image_verts_2d.shape == (num_verts, 2)
    assert bool(jnp.isfinite(deformed_verts).all())
    assert bool(jnp.isfinite(image_verts_2d).all())
    print("KERNEL_OK")
</pallas_src>

<mosaic_0001>
module attributes {stable_mosaic.version = 11 : i64} {
  func.func @_deform_kernel(%arg0: i32, %arg1: memref<4x1280xf32, #tpu.memory_space<vmem>>, %arg2: memref<13x20xf32, #tpu.memory_space<vmem>>, %arg3: memref<20x4xf32, #tpu.memory_space<vmem>>, %arg4: memref<5x1280xf32, #tpu.memory_space<vmem>>) attributes {dimension_semantics = [#tpu.dimension_semantics<parallel>], iteration_bounds = array<i64: 2>, scalar_prefetch = 0 : i64, scratch_operands = 0 : i64, tpu.core_type = #tpu.core_type<tc>, window_params = [{transform_indices = @transform_0, window_bounds = array<i64: 4, 1280>}, {pipeline_mode = #tpu.pipeline_mode<synchronous>, transform_indices = @transform_1, window_bounds = array<i64: 13, 20>}, {pipeline_mode = #tpu.pipeline_mode<synchronous>, transform_indices = @transform_2, window_bounds = array<i64: 20, 4>}, {transform_indices = @transform_3, window_bounds = array<i64: 5, 1280>}]} {
    %c0 = arith.constant 0 : index
    %c0_0 = arith.constant 0 : index
    %0 = vector.load %arg1[%c0, %c0_0] : memref<4x1280xf32, #tpu.memory_space<vmem>>, vector<4x1280xf32>
    %1 = vector.extract_strided_slice %0 {offsets = [0, 0], sizes = [1, 1280], strides = [1, 1]} : vector<4x1280xf32> to vector<1x1280xf32>
    %2 = vector.extract_strided_slice %0 {offsets = [0, 0], sizes = [1, 1280], strides = [1, 1]} : vector<4x1280xf32> to vector<1x1280xf32>
    %3 = arith.mulf %1, %2 : vector<1x1280xf32>
    %4 = vector.extract_strided_slice %0 {offsets = [1, 0], sizes = [1, 1280], strides = [1, 1]} : vector<4x1280xf32> to vector<1x1280xf32>
    %5 = vector.extract_strided_slice %0 {offsets = [1, 0], sizes = [1, 1280], strides = [1, 1]} : vector<4x1280xf32> to vector<1x1280xf32>
    %6 = arith.mulf %4, %5 : vector<1x1280xf32>
    %7 = arith.addf %3, %6 : vector<1x1280xf32>
    %8 = vector.extract_strided_slice %0 {offsets = [2, 0], sizes = [1, 1280], strides = [1, 1]} : vector<4x1280xf32> to vector<1x1280xf32>
    %9 = vector.extract_strided_slice %0 {offsets = [2, 0], sizes = [1, 1280], strides = [1, 1]} : vector<4x1280xf32> to vector<1x1280xf32>
    %10 = arith.mulf %8, %9 : vector<1x1280xf32>
    %11 = arith.addf %7, %10 : vector<1x1280xf32>
    %cst = arith.constant 4.000000e+02 : f32
    %12 = vector.broadcast %cst : f32 to vector<1x1280xf32>
    %13 = arith.mulf %11, %12 : vector<1x1280xf32>
    %c0_1 = arith.constant 0 : index
    %c0_2 = arith.constant 0 : index
    %14 = vector.load %arg3[%c0_1, %c0_2] : memref<20x4xf32, #tpu.memory_space<vmem>>, vector<20x4xf32>
    %cst_3 = arith.constant dense<0.000000e+00> : vector<20x1280xf32>
    %15 = tpu.matmul %14, %0, %cst_3 {dimension_numbers = #tpu.dot_dimension_numbers<[1], [0], [0], [1], [0, 0, 1, 1], [], []>} : vector<20x4xf32>, vector<4x1280xf32>, vector<20x1280xf32> -> vector<20x1280xf32>
    %16 = vector.broadcast %13 : vector<1x1280xf32> to vector<20x1280xf32>
    %17 = arith.addf %15, %16 : vector<20x1280xf32>
    %cst_4 = arith.constant 0.000000e+00 : f32
    %18 = vector.broadcast %cst_4 : f32 to vector<20x1280xf32>
    %19 = arith.maximumf %17, %18 : vector<20x1280xf32>
    %cst_5 = arith.constant 4.000000e-06 : f32
    %20 = vector.broadcast %cst_5 : f32 to vector<20x1280xf32>
    %21 = arith.addf %19, %20 : vector<20x1280xf32>
    %22 = math.sqrt %21 : vector<20x1280xf32>
    %cst_6 = arith.constant 0.000000e+00 : f32
    %23 = vector.broadcast %cst_6 : f32 to vector<20x1280xf32>
    %24 = arith.subf %23, %22 : vector<20x1280xf32>
    %cst_7 = arith.constant dense<0xFF800000> : vector<1280xf32>
    %25 = vector.multi_reduction <maximumf>, %24, %cst_7 [0] : vector<20x1280xf32> to vector<1280xf32>
    %26 = vector.shape_cast %25 : vector<1280xf32> to vector<1x1280xf32>
    %27 = vector.broadcast %26 : vector<1x1280xf32> to vector<20x1280xf32>
    %28 = arith.subf %24, %27 : vector<20x1280xf32>
    %29 = arith.truncf %28 : vector<20x1280xf32> to vector<20x1280xbf16>
    %30 = math.exp %29 : vector<20x1280xbf16>
    %c0_8 = arith.constant 0 : index
    %c0_9 = arith.constant 0 : index
    %31 = vector.load %arg2[%c0_8, %c0_9] : memref<13x20xf32, #tpu.memory_space<vmem>>, vector<13x20xf32>
    %32 = arith.truncf %31 : vector<13x20xf32> to vector<13x20xbf16>
    %cst_10 = arith.constant dense<0.000000e+00> : vector<13x1280xf32>
    %33 = tpu.matmul %32, %30, %cst_10 {dimension_numbers = #tpu.dot_dimension_numbers<[1], [0], [0], [1], [0, 0, 1, 1], [], []>} : vector<13x20xbf16>, vector<20x1280xbf16>, vector<13x1280xf32> -> vector<13x1280xf32>
    %34 = vector.extract_strided_slice %0 {offsets = [0, 0], sizes = [1, 1280], strides = [1, 1]} : vector<4x1280xf32> to vector<1x1280xf32>
    %35 = vector.extract_strided_slice %0 {offsets = [1, 0], sizes = [1, 1280], strides = [1, 1]} : vector<4x1280xf32> to vector<1x1280xf32>
    %36 = vector.extract_strided_slice %0 {offsets = [2, 0], sizes = [1, 1280], strides = [1, 1]} : vector<4x1280xf32> to vector<1x1280xf32>
    %37 = vector.extract_strided_slice %33 {offsets = [0, 0], sizes = [3, 1280], strides = [1, 1]} : vector<13x1280xf32> to vector<3x1280xf32>
    %38 = vector.broadcast %34 : vector<1x1280xf32> to vector<3x1280xf32>
    %39 = arith.mulf %37, %38 : vector<3x1280xf32>
    %40 = vector.extract_strided_slice %33 {offsets = [3, 0], sizes = [3, 1280], strides = [1, 1]} : vector<13x1280xf32> to vector<3x1280xf32>
    %41 = vector.broadcast %35 : vector<1x1280xf32> to vector<3x1280xf32>
    %42 = arith.mulf %40, %41 : vector<3x1280xf32>
    %43 = arith.addf %39, %42 : vector<3x1280xf32>
    %44 = vector.extract_strided_slice %33 {offsets = [6, 0], sizes = [3, 1280], strides = [1, 1]} : vector<13x1280xf32> to vector<3x1280xf32>
    %45 = vector.broadcast %36 : vector<1x1280xf32> to vector<3x1280xf32>
    %46 = arith.mulf %44, %45 : vector<3x1280xf32>
    %47 = arith.addf %43, %46 : vector<3x1280xf32>
    %48 = vector.extract_strided_slice %33 {offsets = [9, 0], sizes = [3, 1280], strides = [1, 1]} : vector<13x1280xf32> to vector<3x1280xf32>
    %49 = arith.addf %47, %48 : vector<3x1280xf32>
    %50 = vector.extract_strided_slice %33 {offsets = [12, 0], sizes = [1, 1280], strides = [1, 1]} : vector<13x1280xf32> to vector<1x1280xf32>
    %51 = tpu.reciprocal %50 : vector<1x1280xf32> -> vector<1x1280xf32>
    %52 = vector.broadcast %51 : vector<1x1280xf32> to vector<3x1280xf32>
    %53 = arith.mulf %49, %52 : vector<3x1280xf32>
    %c0_11 = arith.constant 0 : index
    %c0_12 = arith.constant 0 : index
    %54 = vector.load %arg4[%c0_11, %c0_12] : memref<5x1280xf32, #tpu.memory_space<vmem>>, vector<3x1280xf32>
    tpu.vector_store %arg4[%c0_11, %c0_12], %53 {strides = array<i32>} : memref<5x1280xf32, #tpu.memory_space<vmem>>, vector<3x1280xf32>,
    %55 = vector.extract_strided_slice %53 {offsets = [2, 0], sizes = [1, 1280], strides = [1, 1]} : vector<3x1280xf32> to vector<1x1280xf32>
    %cst_13 = arith.constant 0.000000e+00 : f32
    %56 = vector.broadcast %cst_13 : f32 to vector<1x1280xf32>
    %57 = arith.cmpf oge, %55, %56 : vector<1x1280xf32>
    %cst_14 = arith.constant 9.99999997E-7 : f32
    %58 = vector.broadcast %cst_14 : f32 to vector<1x1280xf32>
    %59 = arith.maximumf %55, %58 : vector<1x1280xf32>
    %cst_15 = arith.constant -9.99999997E-7 : f32
    %60 = vector.broadcast %cst_15 : f32 to vector<1x1280xf32>
    %61 = arith.minimumf %55, %60 : vector<1x1280xf32>
    %62 = arith.select %57, %59, %61 : vector<1x1280xi1>, vector<1x1280xf32>
    %63 = tpu.reciprocal %62 {approx = true} : vector<1x1280xf32> -> vector<1x1280xf32>
    %64 = vector.extract_strided_slice %53 {offsets = [0, 0], sizes = [2, 1280], strides = [1, 1]} : vector<3x1280xf32> to vector<2x1280xf32>
    %cst_16 = arith.constant 2.560000e+02 : f32
    %65 = vector.broadcast %cst_16 : f32 to vector<1x1280xf32>
    %66 = arith.mulf %63, %65 : vector<1x1280xf32>
    %67 = vector.broadcast %66 : vector<1x1280xf32> to vector<2x1280xf32>
    %68 = arith.mulf %64, %67 : vector<2x1280xf32>
    %cst_17 = arith.constant 1.280000e+02 : f32
    %69 = vector.broadcast %cst_17 : f32 to vector<2x1280xf32>
    %70 = arith.addf %68, %69 : vector<2x1280xf32>
    %c3 = arith.constant 3 : index
    %c0_18 = arith.constant 0 : index
    %71 = vector.load %arg4[%c3, %c0_18] : memref<5x1280xf32, #tpu.memory_space<vmem>>, vector<2x1280xf32>
    tpu.vector_store %arg4[%c3, %c0_18], %70 {strides = array<i32>} : memref<5x1280xf32, #tpu.memory_space<vmem>>, vector<2x1280xf32>,
    return
  }
  func.func @transform_0(%arg0: i32) -> (i32, i32) {
    %c0_i32 = arith.constant 0 : i32
    %c0_i32_0 = arith.constant 0 : i32
    return %c0_i32, %arg0 : i32, i32
  }
  func.func @transform_1(%arg0: i32) -> (i32, i32) {
    %c0_i32 = arith.constant 0 : i32
    %c0_i32_0 = arith.constant 0 : i32
    %c0_i32_1 = arith.constant 0 : i32
    return %c0_i32, %c0_i32_0 : i32, i32
  }
  func.func @transform_2(%arg0: i32) -> (i32, i32) {
    %c0_i32 = arith.constant 0 : i32
    %c0_i32_0 = arith.constant 0 : i32
    %c0_i32_1 = arith.constant 0 : i32
    return %c0_i32, %c0_i32_0 : i32, i32
  }
  func.func @transform_3(%arg0: i32) -> (i32, i32) {
    %c0_i32 = arith.constant 0 : i32
    %c0_i32_0 = arith.constant 0 : i32
    return %c0_i32, %arg0 : i32, i32
  }
}

</mosaic_0001>

<llo_original>
// kernel: deform_forward.1
$region0: #{deform_forward.1}
  #allocation0 [shape = 'u32[]', space=smem, size = 0x4, offset = 0x4, fixed_abs, tag = 'smem constant byte address 0x4 - core index']
  #allocation1 [shape = 'u32[144,128]{1,0:T(1,128)}', space=vmem, size = 0x12000, scoped, tag = 'internal scratch']
  %s0 = inlined_call_operand.vmem [shape: f32[4,2560], index: 0, kind: input, shape index: {}]
  %s1 = inlined_call_operand.vmem [shape: f32[13,20], index: 1, kind: input, shape index: {}]
  %s2 = inlined_call_operand.vmem [shape: f32[20,4], index: 2, kind: input, shape index: {}]
  %s3 = inlined_call_operand.vmem [shape: f32[5,2560], index: 3, kind: output, shape index: {}]
  %s4 = sld [smem:[#allocation0]]
  $region45: #{deform_forward.1} parent=0
    _
  %s6 = ssub.s32 1, %s4
  %s7 = scalar_select 0, %s6, %s4
  loop: start=0, step=1, limit=4
  $region2: #{deform_forward.1} parent=0 // loop_pre_header
    _
  $region3: #{deform_forward.1} parent=0 // loop_header
    %s9 = sphi 0, %s13
    %p10 = scmp.ge.s32.totalorder %s9, 4
    %s19 = sphi 0, %s21
    %s22 = sphi 0, %s19
    %s23 = sphi 0, %s22
    %s39 = sphi 0, %s23
    %s43 = sphi 0, %s43
    %s45 = sphi 0, %s43
    %s46 = sphi 0, %s45
    %s60 = sphi 0, %s46
    %s64 = sphi 0, %s64
    %s66 = sphi 0, %s64
    %s67 = sphi 0, %s66
    %s81 = sphi 0, %s67
    %s87 = sphi 0, %s89
    %s90 = sphi 0, %s87
    %s91 = sphi 0, %s90
    %s107 = sphi 0, %s91
  $region4: #{deform_forward.1} parent=0 // loop_header_branch
    %12 = sbr.rel (%p10) target = $region8
  $region5: #{deform_forward.1} parent=0 // loop_body
    %s14 = ssub.s32 %s9, 1
    %s15 = ssub.s32 %s9, 2
    %s16 = sadd.s32 %s9, 1
    %s17 = ssub.s32 %s9, %s16
    %p18 = scmp.eq.s32.totalorder %s17, 0
    %s20 = sadd.s32 %s19, 1
    %s21 = scalar_select %p18, %s19, %s20
    %p24 = pneg %p18
    %p25 = scmp.eq.s32.totalorder %s9, 1
    %p26 = por %p24, %p25
    %p27 = scmp.ne.s32.totalorder %s19, %s22
    %p28 = scmp.eq.s32.totalorder %s9, 0
    %p29 = por %p27, %p28
    %p30 = scmp.ne.s32.totalorder %s19, %s22
    %p31 = scmp.eq.s32.totalorder %s14, 1
    %p32 = por %p30, %p31
    %p33 = scmp.ne.s32.totalorder %s22, %s23
    %p34 = scmp.eq.s32.totalorder %s14, 0
    %p35 = por %p33, %p34
    %p36 = scmp.ne.s32.totalorder %s22, %s23
    %p37 = scmp.eq.s32.totalorder %s15, 1
    %p38 = por %p36, %p37
    %p40 = scmp.ne.s32.totalorder %s23, %s39
    %p41 = scmp.eq.s32.totalorder %s15, 0
    %p42 = por %p40, %p41
    %s44 = sadd.s32 %s43, 1
    %p47 = scmp.eq.s32.totalorder %s9, 1
    %p48 = scmp.ne.s32.totalorder %s43, %s45
    %p49 = scmp.eq.s32.totalorder %s9, 0
    %p50 = por %p48, %p49
    %p51 = scmp.ne.s32.totalorder %s43, %s45
    %p52 = scmp.eq.s32.totalorder %s14, 1
    %p53 = por %p51, %p52
    %p54 = scmp.ne.s32.totalorder %s45, %s46
    %p55 = scmp.eq.s32.totalorder %s14, 0
    %p56 = por %p54, %p55
    %p57 = scmp.ne.s32.totalorder %s45, %s46
    %p58 = scmp.eq.s32.totalorder %s15, 1
    %p59 = por %p57, %p58
    %p61 = scmp.ne.s32.totalorder %s46, %s60
    %p62 = scmp.eq.s32.totalorder %s15, 0
    %p63 = por %p61, %p62
    %s65 = sadd.s32 %s64, 1
    %p68 = scmp.eq.s32.totalorder %s9, 1
    %p69 = scmp.ne.s32.totalorder %s64, %s66
    %p70 = scmp.eq.s32.totalorder %s9, 0
    %p71 = por %p69, %p70
    %p72 = scmp.ne.s32.totalorder %s64, %s66
    %p73 = scmp.eq.s32.totalorder %s14, 1
    %p74 = por %p72, %p73
    %p75 = scmp.ne.s32.totalorder %s66, %s67
    %p76 = scmp.eq.s32.totalorder %s14, 0
    %p77 = por %p75, %p76
    %p78 = scmp.ne.s32.totalorder %s66, %s67
    %p79 = scmp.eq.s32.totalorder %s15, 1
    %p80 = por %p78, %p79
    %p82 = scmp.ne.s32.totalorder %s67, %s81
    %p83 = scmp.eq.s32.totalorder %s15, 0
    %p84 = por %p82, %p83
    %s85 = ssub.s32 %s9, %s16
    %p86 = scmp.eq.s32.totalorder %s85, 0
    %s88 = sadd.s32 %s87, 1
    %s89 = scalar_select %p86, %s87, %s88
    %p92 = pneg %p86
    %p93 = scmp.eq.s32.totalorder %s9, 1
    %p94 = por %p92, %p93
    %p95 = scmp.ne.s32.totalorder %s87, %s90
    %p96 = scmp.eq.s32.totalorder %s9, 0
    %p97 = por %p95, %p96
    %p98 = scmp.ne.s32.totalorder %s87, %s90
    %p99 = scmp.eq.s32.totalorder %s14, 1
    %p100 = por %p98, %p99
    %p101 = scmp.ne.s32.totalorder %s90, %s91
    %p102 = scmp.eq.s32.totalorder %s14, 0
    %p103 = por %p101, %p102
    %p104 = scmp.ne.s32.totalorder %s90, %s91
    %p105 = scmp.eq.s32.totalorder %s15, 1
    %p106 = por %p104, %p105
    %p108 = scmp.ne.s32.totalorder %s91, %s107
    %p109 = scmp.eq.s32.totalorder %s15, 0
    %p110 = por %p108, %p109
    %p111 = scmp.le.s32.totalorder 1, %s9
    %p112 = scmp.lt.s32.totalorder %s9, 3
    %p113 = pnand %p111, %p112
    %p114 = pneg %p113
    // Predicated region
    $region9: #{deform_forward.1} parent=5 // pred_check
      _
    $region10: #{deform_forward.1} parent=5 // pred_check_branch
      %116 = sbr.rel (%p113) target = $region12
    $region11: #{deform_forward.1} parent=5 // pred_region
      %s117 = ssub.s32 %s9, 1
      // Predicated region
      $region13: #{deform_forward.1} parent=11 // pred_check
        %p118 = pneg %p56
      $region14: #{deform_forward.1} parent=11 // pred_check_branch
        %120 = sbr.rel (%p118) target = $region16
      $region15: #{deform_forward.1} parent=11 // pred_region
        _
      $region16: #{deform_forward.1} parent=11 // pred_fallthru
        _
      // Predicated region
      $region17: #{deform_forward.1} parent=11 // pred_check
        %p121 = pneg %p77
      $region18: #{deform_forward.1} parent=11 // pred_check_branch
        %123 = sbr.rel (%p121) target = $region20
      $region19: #{deform_forward.1} parent=11 // pred_region
        _
      $region20: #{deform_forward.1} parent=11 // pred_fallthru
        _
    $region12: #{deform_forward.1} parent=5 // pred_fallthru
      _
    %p124 = scmp.lt.s32.totalorder %s9, 2
    // Predicated region
    $region21: #{deform_forward.1} parent=5 // pred_check
      %p125 = pneg %p124
    $region22: #{deform_forward.1} parent=5 // pred_check_branch
      %127 = sbr.rel (%p125) target = $region24
    $region23: #{deform_forward.1} parent=5 // pred_region
      // Predicated region
      $region25: #{deform_forward.1} parent=23 // pred_check
        %p128 = pneg %p29
      $region26: #{deform_forward.1} parent=23 // pred_check_branch
        %130 = sbr.rel (%p128) target = $region28
      $region27: #{deform_forward.1} parent=23 // pred_region
        %s131 = smul.u32 10, %s9
        %p132 = scmp.lt.s32.totalorder %s131, 19
        %s133 = scalar_select %p132, %s131, 19
        %s134 = smul.addr %s133, 4
        %s135 = scalar_lea.vmem %s0, %s134
        %s136 = smul.u32 10, %s9
      $region28: #{deform_forward.1} parent=23 // pred_fallthru
        _
    $region24: #{deform_forward.1} parent=5 // pred_fallthru
      _
    %p137 = scmp.le.s32.totalorder 1, %s9
    %p138 = scmp.lt.s32.totalorder %s9, 3
    %p139 = pnand %p137, %p138
    %p140 = pneg %p139
    // Predicated region
    $region29: #{deform_forward.1} parent=5 // pred_check
      _
    $region30: #{deform_forward.1} parent=5 // pred_check_branch
      %142 = sbr.rel (%p139) target = $region32
    $region31: #{deform_forward.1} parent=5 // pred_region
      %s143 = ssub.s32 %s9, 1
      %s144 = smul.u32 10, %s14
      %p145 = scmp.lt.s32.totalorder %s144, 19
      %s146 = scalar_select %p145, %s144, 19
      %s147 = smul.addr %s146, 4
      %s148 = scalar_lea.vmem %s0, %s147
      %p149 = pneg %p35
      %p150 = pneg %p32
      %p151 = pneg %p56
      %p152 = pneg %p53
      %p153 = pneg %p77
      %p154 = pneg %p74
      %p155 = pneg %p103
      %p156 = pneg %p100
      %s157 = smul.u32 10, %s14
      %p158 = scmp.lt.s32.totalorder %s157, 19
      %s159 = scalar_select %p158, %s157, 19
      %s160 = smul.addr %s159, 8
      %s161 = scalar_lea.vmem %s3, %s160
      %s162 = smul.u32 10, %s14
      %p163 = scmp.lt.s32.totalorder %s162, 19
      %s164 = scalar_select %p163, %s162, 19
      %s165 = smul.addr %s164, 4
      %s166 = scalar_lea.vmem %s0, %s165
      %s167 = smul.u32 10, %s14
      %s168 = smul.u32 10, %s14
      %p169 = scmp.lt.s32.totalorder %s168, 19
      %s170 = scalar_select %p169, %s168, 19
      %s171 = smul.addr %s170, 8
      %s172 = scalar_lea.vmem %s3, %s171
      %s173 = smul.u32 10, %s14
      %v175 = vld [vmem:[%s166] sm:$0xff]
      %v176 = vld [vmem:[%s166 + $0x8] sm:$0xff]
      %v177 = vld [vmem:[%s166 + $0x10] sm:$0xff]
      %v178 = vld [vmem:[%s166 + $0x18] sm:$0xff]
      %v179 = vld [vmem:[%s166 + $0x20] sm:$0xff]
      %v180 = vmul.f32 %v175, %v175
      %v181 = vmul.f32 %v176, %v176
      %v182 = vmul.f32 %v177, %v177
      %v183 = vmul.f32 %v178, %v178
      %v184 = vmul.f32 %v179, %v179
      %v190 = vrot.slane %v180, 5
      %v191 = vrot.slane %v190, 4
      %v192 = vrot.slane %v181, 5
      %v193 = vrot.slane %v192, 4
      %v194 = vrot.slane %v182, 5
      %v195 = vrot.slane %v194, 4
      %v196 = vrot.slane %v183, 5
      %v197 = vrot.slane %v196, 4
      %v198 = vrot.slane %v184, 5
      %v199 = vrot.slane %v198, 4
      %v205 = vadd.f32 %v180, %v191
      %v206 = vadd.f32 %v181, %v193
      %v207 = vadd.f32 %v182, %v195
      %v208 = vadd.f32 %v183, %v197
      %v209 = vadd.f32 %v184, %v199
      %v210 = vrot.slane %v180, 6
      %v211 = vrot.slane %v210, 4
      %v212 = vrot.slane %v181, 6
      %v213 = vrot.slane %v212, 4
      %v214 = vrot.slane %v182, 6
      %v215 = vrot.slane %v214, 4
      %v216 = vrot.slane %v183, 6
      %v217 = vrot.slane %v216, 4
      %v218 = vrot.slane %v184, 6
      %v219 = vrot.slane %v218, 4
      %v225 = vadd.f32 %v205, %v211
      %v226 = vadd.f32 %v206, %v213
      %v227 = vadd.f32 %v207, %v215
      %v228 = vadd.f32 %v208, %v217
      %v229 = vadd.f32 %v209, %v219
      %v230 = vmul.f32 %v225, 400.0
      %v231 = vmul.f32 %v226, 400.0
      %v232 = vmul.f32 %v227, 400.0
      %v233 = vmul.f32 %v228, 400.0
      %v234 = vmul.f32 %v229, 400.0
      %v235 = vld [vmem:[%s2] sm:$0xff]
      %v236 = vld [vmem:[%s2 + $0x8] sm:$0xff]
      %v237 = vld [vmem:[%s2 + $0x10] sm:$0xf]
      %v243 = vlaneseq
      %v244 = vshrl.u32 %v243, 7
      %v245 = vsub.s32 0, %v244
      %v246 = vrot.slane %v230, %v245
      %v247 = vlaneseq
      %v248 = vshrl.u32 %v247, 7
      %v249 = vsub.s32 4, %v248
      %v250 = vrot.slane %v230, %v249
      %v251 = vlaneseq
      %v252 = vshrl.u32 %v251, 7
      %v253 = vsub.s32 0, %v252
      %v254 = vrot.slane %v231, %v253
      %v255 = vlaneseq
      %v256 = vshrl.u32 %v255, 7
      %v257 = vsub.s32 4, %v256
      %v258 = vrot.slane %v231, %v257
      %v259 = vlaneseq
      %v260 = vshrl.u32 %v259, 7
      %v261 = vsub.s32 0, %v260
      %v262 = vrot.slane %v232, %v261
      %v263 = vlaneseq
      %v264 = vshrl.u32 %v263, 7
      %v265 = vsub.s32 4, %v264
      %v266 = vrot.slane %v232, %v265
      %v267 = vlaneseq
      %v268 = vshrl.u32 %v267, 7
      %v269 = vsub.s32 0, %v268
      %v270 = vrot.slane %v233, %v269
      %v271 = vlaneseq
      %v272 = vshrl.u32 %v271, 7
      %v273 = vsub.s32 4, %v272
      %v274 = vrot.slane %v233, %v273
      %v275 = vlaneseq
      %v276 = vshrl.u32 %v275, 7
      %v277 = vsub.s32 0, %v276
      %v278 = vrot.slane %v234, %v277
      %v279 = vlaneseq
      %v280 = vshrl.u32 %v279, 7
      %v281 = vsub.s32 4, %v280
      %v282 = vrot.slane %v234, %v281
      %v293 = vlaneseq
      %v294 = vshrl.u32 %v293, 7
      %v295 = vsub.s32 0, %v294
      %v296 = vrot.slane %v246, %v295
      %v297 = vlaneseq
      %v298 = vshrl.u32 %v297, 7
      %v299 = vsub.s32 0, %v298
      %v300 = vrot.slane %v250, %v299
      %v301 = vlaneseq
      %v302 = vshrl.u32 %v301, 7
      %v303 = vsub.s32 0, %v302
      %v304 = vrot.slane %v254, %v303
      %v305 = vlaneseq
      %v306 = vshrl.u32 %v305, 7
      %v307 = vsub.s32 0, %v306
      %v308 = vrot.slane %v258, %v307
      %v309 = vlaneseq
      %v310 = vshrl.u32 %v309, 7
      %v311 = vsub.s32 0, %v310
      %v312 = vrot.slane %v262, %v311
      %v313 = vlaneseq
      %v314 = vshrl.u32 %v313, 7
      %v315 = vsub.s32 0, %v314
      %v316 = vrot.slane %v266, %v315
      %v317 = vlaneseq
      %v318 = vshrl.u32 %v317, 7
      %v319 = vsub.s32 0, %v318
      %v320 = vrot.slane %v270, %v319
      %v321 = vlaneseq
      %v322 = vshrl.u32 %v321, 7
      %v323 = vsub.s32 0, %v322
      %v324 = vrot.slane %v274, %v323
      %v325 = vlaneseq
      %v326 = vshrl.u32 %v325, 7
      %v327 = vsub.s32 0, %v326
      %v328 = vrot.slane %v278, %v327
      %v329 = vlaneseq
      %v330 = vshrl.u32 %v329, 7
      %v331 = vsub.s32 0, %v330
      %v332 = vrot.slane %v282, %v331
      %v338 = vcombine.high %v175, %v175
      %v339 = vcombine.high %v176, %v176
      %v340 = vcombine.high %v177, %v177
      %v341 = vcombine.high %v178, %v178
      %v342 = vcombine.high %v179, %v179
      %vm343 = vcmask 31744
      %v345 = vsel %vm343, %v235, 0
      %v348 = vsel %vm343, %v236, 0
      %v351 = vsel %vm343, %v237, 0
      %vm353 = vcmask 1043456
      %v354 = vsel %vm353, %v175, 0
      %v356 = vsel %vm353, %v338, 0
      %v358 = vsel %vm353, %v176, 0
      %v360 = vsel %vm353, %v339, 0
      %v362 = vsel %vm353, %v177, 0
      %v364 = vsel %vm353, %v340, 0
      %v366 = vsel %vm353, %v178, 0
      %v368 = vsel %vm353, %v341, 0
      %v370 = vsel %vm353, %v179, 0
      %v372 = vsel %vm353, %v342, 0
      %374 = vmatprep.subr.mxu0 %v356
      %375 = vmatpush1.msra.mxu0 %v354
      %376 = vmatprep.subr.mxu0 0.0
      %377 = vmatpush1.msra.mxu0 0.0
      %378 = vmatprep.subr.mxu0 0.0
      %379 = vmatpush1.msra.mxu0 0.0
      %380 = vmatprep.subr.mxu0 0.0
      %381 = vmatpush1.msra.mxu0 0.0
      %382 = vmatprep.subr.mxu0 0.0
      %383 = vmatpush1.msra.mxu0 0.0
      %384 = vmatprep.subr.mxu0 0.0
      %385 = vmatpush1.msra.mxu0 0.0
      %386 = vmatprep.subr.mxu0 0.0
      %387 = vmatpush1.msra.mxu0 0.0
      %388 = vmatprep.subr.mxu0 0.0
      %389 = vmatpush1.msra.mxu0 0.0
      %390 = vmatprep.subr.mxu0 0.0
      %391 = vmatpush1.msra.mxu0 0.0
      %392 = vmatprep.subr.mxu0 0.0
      %393 = vmatpush1.msra.mxu0 0.0
      %394 = vmatprep.subr.mxu0 0.0
      %395 = vmatpush1.msra.mxu0 0.0
      %396 = vmatprep.subr.mxu0 0.0
      %397 = vmatpush1.msra.mxu0 0.0
      %398 = vmatprep.subr.mxu0 0.0
      %399 = vmatpush1.msra.mxu0 0.0
      %400 = vmatprep.subr.mxu0 0.0
      %401 = vmatpush1.msra.mxu0 0.0
      %402 = vmatprep.subr.mxu0 0.0
      %403 = vmatpush1.msra.mxu0 0.0
      %404 = vmatprep.subr.mxu0 0.0
      %405 = vmatpush1.msra.mxu0 0.0
      %406 = vmatprep.subr.mxu0 0.0
      %407 = vmatpush1.msra.mxu0 0.0
      %408 = vmatprep.subr.mxu0 0.0
      %409 = vmatpush1.msra.mxu0 0.0
      %410 = vmatprep.subr.mxu0 0.0
      %411 = vmatpush1.msra.mxu0 0.0
      %412 = vmatprep.subr.mxu0 0.0
      %413 = vmatpush1.msra.mxu0 0.0
      %414 = vmatprep.subr.mxu0 0.0
      %415 = vmatpush1.msra.mxu0 0.0
      %416 = vmatprep.subr.mxu0 0.0
      %417 = vmatpush1.msra.mxu0 0.0
      %418 = vmatprep.subr.mxu0 0.0
      %419 = vmatpush1.msra.mxu0 0.0
      %420 = vmatprep.subr.mxu0 0.0
      %421 = vmatpush1.msra.mxu0 0.0
      %422 = vmatprep.subr.mxu0 0.0
      %423 = vmatpush1.msra.mxu0 0.0
      %424 = vmatprep.subr.mxu0 0.0
      %425 = vmatpush1.msra.mxu0 0.0
      %426 = vmatprep.subr.mxu0 0.0
      %427 = vmatpush1.msra.mxu0 0.0
      %428 = vmatprep.subr.mxu0 0.0
      %429 = vmatpush1.msra.mxu0 0.0
      %430 = vmatprep.subr.mxu0 0.0
      %431 = vmatpush1.msra.mxu0 0.0
      %432 = vmatprep.subr.mxu0 0.0
      %433 = vmatpush1.msra.mxu0 0.0
      %434 = vmatprep.subr.mxu0 0.0
      %435 = vmatpush1.msra.mxu0 0.0
      %436 = vmatprep.subr.mxu0 0.0
      %437 = vmatpush1.msra.mxu0 0.0
      %438 = vmatprep.mubr.f32.mxu0 0.0
      %439 = vmatmul.mubr.f32.gmra.mrb[0].mxu0 %v345
      %v440 = vpop.f32.mrb[0].mxu0
      %v441 = vadd.f32 %v296, %v440
      %v442 = vpop.f32.mrb[0].mxu0
      %v443 = vadd.f32 %v300, %v442
      %444 = vmatprep.mubr.f32.mxu0 0.0
      %445 = vmatmul.mubr.f32.gmra.mrb[0].mxu0 %v348
      %v446 = vpop.f32.mrb[0].mxu0
      %v447 = vadd.f32 %v296, %v446
      %v448 = vpop.f32.mrb[0].mxu0
      %v449 = vadd.f32 %v300, %v448
      %450 = vmatprep.mubr.f32.mxu0 0.0
      %451 = vmatmul.mubr.f32.gmra.mrb[0].mxu0 %v351
      %v452 = vpop.f32.mrb[0].mxu0
      %v453 = vadd.f32 %v296, %v452
      %v454 = vpop.f32.mrb[0].mxu0
      %v455 = vadd.f32 %v300, %v454
      %456 = vdwg.mxu0
      %457 = vmatprep.subr.mxu0 %v360
      %458 = vmatpush1.msra.mxu0 %v358
      %459 = vmatprep.subr.mxu0 0.0
      %460 = vmatpush1.msra.mxu0 0.0
      %461 = vmatprep.subr.mxu0 0.0
      %462 = vmatpush1.msra.mxu0 0.0
      %463 = vmatprep.subr.mxu0 0.0
      %464 = vmatpush1.msra.mxu0 0.0
      %465 = vmatprep.subr.mxu0 0.0
      %466 = vmatpush1.msra.mxu0 0.0
      %467 = vmatprep.subr.mxu0 0.0
      %468 = vmatpush1.msra.mxu0 0.0
      %469 = vmatprep.subr.mxu0 0.0
      %470 = vmatpush1.msra.mxu0 0.0
      %471 = vmatprep.subr.mxu0 0.0
      %472 = vmatpush1.msra.mxu0 0.0
      %473 = vmatprep.subr.mxu0 0.0
      %474 = vmatpush1.msra.mxu0 0.0
      %475 = vmatprep.subr.mxu0 0.0
      %476 = vmatpush1.msra.mxu0 0.0
      %477 = vmatprep.subr.mxu0 0.0
      %478 = vmatpush1.msra.mxu0 0.0
      %479 = vmatprep.subr.mxu0 0.0
      %480 = vmatpush1.msra.mxu0 0.0
      %481 = vmatprep.subr.mxu0 0.0
      %482 = vmatpush1.msra.mxu0 0.0
      %483 = vmatprep.subr.mxu0 0.0
      %484 = vmatpush1.msra.mxu0 0.0
      %485 = vmatprep.subr.mxu0 0.0
      %486 = vmatpush1.msra.mxu0 0.0
      %487 = vmatprep.subr.mxu0 0.0
      %488 = vmatpush1.msra.mxu0 0.0
      %489 = vmatprep.subr.mxu0 0.0
      %490 = vmatpush1.msra.mxu0 0.0
      %491 = vmatprep.subr.mxu0 0.0
      %492 = vmatpush1.msra.mxu0 0.0
      %493 = vmatprep.subr.mxu0 0.0
      %494 = vmatpush1.msra.mxu0 0.0
      %495 = vmatprep.subr.mxu0 0.0
      %496 = vmatpush1.msra.mxu0 0.0
      %497 = vmatprep.subr.mxu0 0.0
      %498 = vmatpush1.msra.mxu0 0.0
      %499 = vmatprep.subr.mxu0 0.0
      %500 = vmatpush1.msra.mxu0 0.0
      %501 = vmatprep.subr.mxu0 0.0
      %502 = vmatpush1.msra.mxu0 0.0
      %503 = vmatprep.subr.mxu0 0.0
      %504 = vmatpush1.msra.mxu0 0.0
      %505 = vmatprep.subr.mxu0 0.0
      %506 = vmatpush1.msra.mxu0 0.0
      %507 = vmatprep.subr.mxu0 0.0
      %508 = vmatpush1.msra.mxu0 0.0
      %509 = vmatprep.subr.mxu0 0.0
      %510 = vmatpush1.msra.mxu0 0.0
      %511 = vmatprep.subr.mxu0 0.0
      %512 = vmatpush1.msra.mxu0 0.0
      %513 = vmatprep.subr.mxu0 0.0
      %514 = vmatpush1.msra.mxu0 0.0
      %515 = vmatprep.subr.mxu0 0.0
      %516 = vmatpush1.msra.mxu0 0.0
      %517 = vmatprep.subr.mxu0 0.0
      %518 = vmatpush1.msra.mxu0 0.0
      %519 = vmatprep.subr.mxu0 0.0
      %520 = vmatpush1.msra.mxu0 0.0
      %521 = vmatprep.mubr.f32.mxu0 0.0
      %522 = vmatmul.mubr.f32.gmra.mrb[0].mxu0 %v345
      %v523 = vpop.f32.mrb[0].mxu0
      %v524 = vadd.f32 %v304, %v523
      %v525 = vpop.f32.mrb[0].mxu0
      %v526 = vadd.f32 %v308, %v525
      %527 = vmatprep.mubr.f32.mxu0 0.0
      %528 = vmatmul.mubr.f32.gmra.mrb[0].mxu0 %v348
      %v529 = vpop.f32.mrb[0].mxu0
      %v530 = vadd.f32 %v304, %v529
      %v531 = vpop.f32.mrb[0].mxu0
      %v532 = vadd.f32 %v308, %v531
      %533 = vmatprep.mubr.f32.mxu0 0.0
      %534 = vmatmul.mubr.f32.gmra.mrb[0].mxu0 %v351
      %v535 = vpop.f32.mrb[0].mxu0
      %v536 = vadd.f32 %v304, %v535
      %v537 = vpop.f32.mrb[0].mxu0
      %v538 = vadd.f32 %v308, %v537
      %539 = vdwg.mxu0
      %540 = vmatprep.subr.mxu0 %v364
      %541 = vmatpush1.msra.mxu0 %v362
      %542 = vmatprep.subr.mxu0 0.0
      %543 = vmatpush1.msra.mxu0 0.0
      %544 = vmatprep.subr.mxu0 0.0
      %545 = vmatpush1.msra.mxu0 0.0
      %546 = vmatprep.subr.mxu0 0.0
      %547 = vmatpush1.msra.mxu0 0.0
      %548 = vmatprep.subr.mxu0 0.0
      %549 = vmatpush1.msra.mxu0 0.0
      %550 = vmatprep.subr.mxu0 0.0
      %551 = vmatpush1.msra.mxu0 0.0
      %552 = vmatprep.subr.mxu0 0.0
      %553 = vmatpush1.msra.mxu0 0.0
      %554 = vmatprep.subr.mxu0 0.0
      %555 = vmatpush1.msra.mxu0 0.0
      %556 = vmatprep.subr.mxu0 0.0
      %557 = vmatpush1.msra.mxu0 0.0
      %558 = vmatprep.subr.mxu0 0.0
      %559 = vmatpush1.msra.mxu0 0.0
      %560 = vmatprep.subr.mxu0 0.0
      %561 = vmatpush1.msra.mxu0 0.0
      %562 = vmatprep.subr.mxu0 0.0
      %563 = vmatpush1.msra.mxu0 0.0
      %564 = vmatprep.subr.mxu0 0.0
      %565 = vmatpush1.msra.mxu0 0.0
      %566 = vmatprep.subr.mxu0 0.0
      %567 = vmatpush1.msra.mxu0 0.0
      %568 = vmatprep.subr.mxu0 0.0
      %569 = vmatpush1.msra.mxu0 0.0
      %570 = vmatprep.subr.mxu0 0.0
      %571 = vmatpush1.msra.mxu0 0.0
      %572 = vmatprep.subr.mxu0 0.0
      %573 = vmatpush1.msra.mxu0 0.0
      %574 = vmatprep.subr.mxu0 0.0
      %575 = vmatpush1.msra.mxu0 0.0
      %576 = vmatprep.subr.mxu0 0.0
      %577 = vmatpush1.msra.mxu0 0.0
      %578 = vmatprep.subr.mxu0 0.0
      %579 = vmatpush1.msra.mxu0 0.0
      %580 = vmatprep.subr.mxu0 0.0
      %581 = vmatpush1.msra.mxu0 0.0
      %582 = vmatprep.subr.mxu0 0.0
      %583 = vmatpush1.msra.mxu0 0.0
      %584 = vmatprep.subr.mxu0 0.0
      %585 = vmatpush1.msra.mxu0 0.0
      %586 = vmatprep.subr.mxu0 0.0
      %587 = vmatpush1.msra.mxu0 0.0
      %588 = vmatprep.subr.mxu0 0.0
      %589 = vmatpush1.msra.mxu0 0.0
      %590 = vmatprep.subr.mxu0 0.0
      %591 = vmatpush1.msra.mxu0 0.0
      %592 = vmatprep.subr.mxu0 0.0
      %593 = vmatpush1.msra.mxu0 0.0
      %594 = vmatprep.subr.mxu0 0.0
      %595 = vmatpush1.msra.mxu0 0.0
      %596 = vmatprep.subr.mxu0 0.0
      %597 = vmatpush1.msra.mxu0 0.0
      %598 = vmatprep.subr.mxu0 0.0
      %599 = vmatpush1.msra.mxu0 0.0
      %600 = vmatprep.subr.mxu0 0.0
      %601 = vmatpush1.msra.mxu0 0.0
      %602 = vmatprep.subr.mxu0 0.0
      %603 = vmatpush1.msra.mxu0 0.0
      %604 = vmatprep.mubr.f32.mxu0 0.0
      %605 = vmatmul.mubr.f32.gmra.mrb[0].mxu0 %v345
      %v606 = vpop.f32.mrb[0].mxu0
      %v607 = vadd.f32 %v312, %v606
      %v608 = vpop.f32.mrb[0].mxu0
      %v609 = vadd.f32 %v316, %v608
      %610 = vmatprep.mubr.f32.mxu0 0.0
      %611 = vmatmul.mubr.f32.gmra.mrb[0].mxu0 %v348
      %v612 = vpop.f32.mrb[0].mxu0
      %v613 = vadd.f32 %v312, %v612
      %v614 = vpop.f32.mrb[0].mxu0
      %v615 = vadd.f32 %v316, %v614
      %616 = vmatprep.mubr.f32.mxu0 0.0
      %617 = vmatmul.mubr.f32.gmra.mrb[0].mxu0 %v351
      %v618 = vpop.f32.mrb[0].mxu0
      %v619 = vadd.f32 %v312, %v618
      %v620 = vpop.f32.mrb[0].mxu0
      %v621 = vadd.f32 %v316, %v620
      %622 = vdwg.mxu0
      %623 = vmatprep.subr.mxu0 %v368
      %624 = vmatpush1.msra.mxu0 %v366
      %625 = vmatprep.subr.mxu0 0.0
      %626 = vmatpush1.msra.mxu0 0.0
      %627 = vmatprep.subr.mxu0 0.0
      %628 = vmatpush1.msra.mxu0 0.0
      %629 = vmatprep.subr.mxu0 0.0
      %630 = vmatpush1.msra.mxu0 0.0
      %631 = vmatprep.subr.mxu0 0.0
      %632 = vmatpush1.msra.mxu0 0.0
      %633 = vmatprep.subr.mxu0 0.0
      %634 = vmatpush1.msra.mxu0 0.0
      %635 = vmatprep.subr.mxu0 0.0
      %636 = vmatpush1.msra.mxu0 0.0
      %637 = vmatprep.subr.mxu0 0.0
      %638 = vmatpush1.msra.mxu0 0.0
      %639 = vmatprep.subr.mxu0 0.0
      %640 = vmatpush1.msra.mxu0 0.0
      %641 = vmatprep.subr.mxu0 0.0
      %642 = vmatpush1.msra.mxu0 0.0
      %643 = vmatprep.subr.mxu0 0.0
      %644 = vmatpush1.msra.mxu0 0.0
      %645 = vmatprep.subr.mxu0 0.0
      %646 = vmatpush1.msra.mxu0 0.0
      %647 = vmatprep.subr.mxu0 0.0
      %648 = vmatpush1.msra.mxu0 0.0
      %649 = vmatprep.subr.mxu0 0.0
      %650 = vmatpush1.msra.mxu0 0.0
      %651 = vmatprep.subr.mxu0 0.0
      %652 = vmatpush1.msra.mxu0 0.0
      %653 = vmatprep.subr.mxu0 0.0
      %654 = vmatpush1.msra.mxu0 0.0
      %655 = vmatprep.subr.mxu0 0.0
      %656 = vmatpush1.msra.mxu0 0.0
      %657 = vmatprep.subr.mxu0 0.0
      %658 = vmatpush1.msra.mxu0 0.0
      %659 = vmatprep.subr.mxu0 0.0
      %660 = vmatpush1.msra.mxu0 0.0
      %661 = vmatprep.subr.mxu0 0.0
      %662 = vmatpush1.msra.mxu0 0.0
      %663 = vmatprep.subr.mxu0 0.0
      %664 = vmatpush1.msra.mxu0 0.0
      %665 = vmatprep.subr.mxu0 0.0
      %666 = vmatpush1.msra.mxu0 0.0
      %667 = vmatprep.subr.mxu0 0.0
      %668 = vmatpush1.msra.mxu0 0.0
      %669 = vmatprep.subr.mxu0 0.0
      %670 = vmatpush1.msra.mxu0 0.0
      %671 = vmatprep.subr.mxu0 0.0
      %672 = vmatpush1.msra.mxu0 0.0
      %673 = vmatprep.subr.mxu0 0.0
      %674 = vmatpush1.msra.mxu0 0.0
      %675 = vmatprep.subr.mxu0 0.0
      %676 = vmatpush1.msra.mxu0 0.0
      %677 = vmatprep.subr.mxu0 0.0
      %678 = vmatpush1.msra.mxu0 0.0
      %679 = vmatprep.subr.mxu0 0.0
      %680 = vmatpush1.msra.mxu0 0.0
      %681 = vmatprep.subr.mxu0 0.0
      %682 = vmatpush1.msra.mxu0 0.0
      %683 = vmatprep.subr.mxu0 0.0
      %684 = vmatpush1.msra.mxu0 0.0
      %685 = vmatprep.subr.mxu0 0.0
      %686 = vmatpush1.msra.mxu0 0.0
      %687 = vmatprep.mubr.f32.mxu0 0.0
      %688 = vmatmul.mubr.f32.gmra.mrb[0].mxu0 %v345
      %v689 = vpop.f32.mrb[0].mxu0
      %v690 = vadd.f32 %v320, %v689
      %v691 = vpop.f32.mrb[0].mxu0
      %v692 = vadd.f32 %v324, %v691
      %693 = vmatprep.mubr.f32.mxu0 0.0
      %694 = vmatmul.mubr.f32.gmra.mrb[0].mxu0 %v348
      %v695 = vpop.f32.mrb[0].mxu0
      %v696 = vadd.f32 %v320, %v695
      %v697 = vpop.f32.mrb[0].mxu0
      %v698 = vadd.f32 %v324, %v697
      %699 = vmatprep.mubr.f32.mxu0 0.0
      %700 = vmatmul.mubr.f32.gmra.mrb[0].mxu0 %v351
      %v701 = vpop.f32.mrb[0].mxu0
      %v702 = vadd.f32 %v320, %v701
      %v703 = vpop.f32.mrb[0].mxu0
      %v704 = vadd.f32 %v324, %v703
      %705 = vdwg.mxu0
      %706 = vmatprep.subr.mxu0 %v372
      %707 = vmatpush1.msra.mxu0 %v370
      %708 = vmatprep.subr.mxu0 0.0
      %709 = vmatpush1.msra.mxu0 0.0
      %710 = vmatprep.subr.mxu0 0.0
      %711 = vmatpush1.msra.mxu0 0.0
      %712 = vmatprep.subr.mxu0 0.0
      %713 = vmatpush1.msra.mxu0 0.0
      %714 = vmatprep.subr.mxu0 0.0
      %715 = vmatpush1.msra.mxu0 0.0
      %716 = vmatprep.subr.mxu0 0.0
      %717 = vmatpush1.msra.mxu0 0.0
      %718 = vmatprep.subr.mxu0 0.0
      %719 = vmatpush1.msra.mxu0 0.0
      %720 = vmatprep.subr.mxu0 0.0
      %721 = vmatpush1.msra.mxu0 0.0
      %722 = vmatprep.subr.mxu0 0.0
      %723 = vmatpush1.msra.mxu0 0.0
      %724 = vmatprep.subr.mxu0 0.0
      %725 = vmatpush1.msra.mxu0 0.0
      %726 = vmatprep.subr.mxu0 0.0
      %727 = vmatpush1.msra.mxu0 0.0
      %728 = vmatprep.subr.mxu0 0.0
      %729 = vmatpush1.msra.mxu0 0.0
      %730 = vmatprep.subr.mxu0 0.0
      %731 = vmatpush1.msra.mxu0 0.0
      %732 = vmatprep.subr.mxu0 0.0
      %733 = vmatpush1.msra.mxu0 0.0
      %734 = vmatprep.subr.mxu0 0.0
      %735 = vmatpush1.msra.mxu0 0.0
      %736 = vmatprep.subr.mxu0 0.0
      %737 = vmatpush1.msra.mxu0 0.0
      %738 = vmatprep.subr.mxu0 0.0
      %739 = vmatpush1.msra.mxu0 0.0
      %740 = vmatprep.subr.mxu0 0.0
      %741 = vmatpush1.msra.mxu0 0.0
      %742 = vmatprep.subr.mxu0 0.0
      %743 = vmatpush1.msra.mxu0 0.0
      %744 = vmatprep.subr.mxu0 0.0
      %745 = vmatpush1.msra.mxu0 0.0
      %746 = vmatprep.subr.mxu0 0.0
      %747 = vmatpush1.msra.mxu0 0.0
      %748 = vmatprep.subr.mxu0 0.0
      %749 = vmatpush1.msra.mxu0 0.0
      %750 = vmatprep.subr.mxu0 0.0
      %751 = vmatpush1.msra.mxu0 0.0
      %752 = vmatprep.subr.mxu0 0.0
      %753 = vmatpush1.msra.mxu0 0.0
      %754 = vmatprep.subr.mxu0 0.0
      %755 = vmatpush1.msra.mxu0 0.0
      %756 = vmatprep.subr.mxu0 0.0
      %757 = vmatpush1.msra.mxu0 0.0
      %758 = vmatprep.subr.mxu0 0.0
      %759 = vmatpush1.msra.mxu0 0.0
      %760 = vmatprep.subr.mxu0 0.0
      %761 = vmatpush1.msra.mxu0 0.0
      %762 = vmatprep.subr.mxu0 0.0
      %763 = vmatpush1.msra.mxu0 0.0
      %764 = vmatprep.subr.mxu0 0.0
      %765 = vmatpush1.msra.mxu0 0.0
      %766 = vmatprep.subr.mxu0 0.0
      %767 = vmatpush1.msra.mxu0 0.0
      %768 = vmatprep.subr.mxu0 0.0
      %769 = vmatpush1.msra.mxu0 0.0
      %770 = vmatprep.mubr.f32.mxu0 0.0
      %771 = vmatmul.mubr.f32.gmra.mrb[0].mxu0 %v345
      %v772 = vpop.f32.mrb[0].mxu0
      %v773 = vadd.f32 %v328, %v772
      %v774 = vpop.f32.mrb[0].mxu0
      %v775 = vadd.f32 %v332, %v774
      %776 = vmatprep.mubr.f32.mxu0 0.0
      %777 = vmatmul.mubr.f32.gmra.mrb[0].mxu0 %v348
      %v778 = vpop.f32.mrb[0].mxu0
      %v779 = vadd.f32 %v328, %v778
      %v780 = vpop.f32.mrb[0].mxu0
      %v781 = vadd.f32 %v332, %v780
      %782 = vmatprep.mubr.f32.mxu0 0.0
      %783 = vmatmul.mubr.f32.gmra.mrb[0].mxu0 %v351
      %v784 = vpop.f32.mrb[0].mxu0
      %v785 = vadd.f32 %v328, %v784
      %v786 = vpop.f32.mrb[0].mxu0
      %v787 = vadd.f32 %v332, %v786
      %788 = vdwg.mxu0
      %v789 = vmax.f32 %v441, 0.0
      %v790 = vmax.f32 %v443, 0.0
      %v791 = vmax.f32 %v524, 0.0
      %v792 = vmax.f32 %v526, 0.0
      %v793 = vmax.f32 %v607, 0.0
      %v794 = vmax.f32 %v609, 0.0
      %v795 = vmax.f32 %v690, 0.0
      %v796 = vmax.f32 %v692, 0.0
      %v797 = vmax.f32 %v773, 0.0
      %v798 = vmax.f32 %v775, 0.0
      %v799 = vmax.f32 %v447, 0.0
      %v800 = vmax.f32 %v449, 0.0
      %v801 = vmax.f32 %v530, 0.0
      %v802 = vmax.f32 %v532, 0.0
      %v803 = vmax.f32 %v613, 0.0
      %v804 = vmax.f32 %v615, 0.0
      %v805 = vmax.f32 %v696, 0.0
      %v806 = vmax.f32 %v698, 0.0
      %v807 = vmax.f32 %v779, 0.0
      %v808 = vmax.f32 %v781, 0.0
      %v809 = vmax.f32 %v453, 0.0
      %v810 = vmax.f32 %v455, 0.0
      %v811 = vmax.f32 %v536, 0.0
      %v812 = vmax.f32 %v538, 0.0
      %v813 = vmax.f32 %v619, 0.0
      %v814 = vmax.f32 %v621, 0.0
      %v815 = vmax.f32 %v702, 0.0
      %v816 = vmax.f32 %v704, 0.0
      %v817 = vmax.f32 %v785, 0.0
      %v818 = vmax.f32 %v787, 0.0
      %v819 = vadd.f32 %v789, 4e-06
      %v820 = vadd.f32 %v790, 4e-06
      %v821 = vadd.f32 %v791, 4e-06
      %v822 = vadd.f32 %v792, 4e-06
      %v823 = vadd.f32 %v793, 4e-06
      %v824 = vadd.f32 %v794, 4e-06
      %v825 = vadd.f32 %v795, 4e-06
      %v826 = vadd.f32 %v796, 4e-06
      %v827 = vadd.f32 %v797, 4e-06
      %v828 = vadd.f32 %v798, 4e-06
      %v829 = vadd.f32 %v799, 4e-06
      %v830 = vadd.f32 %v800, 4e-06
      %v831 = vadd.f32 %v801, 4e-06
      %v832 = vadd.f32 %v802, 4e-06
      %v833 = vadd.f32 %v803, 4e-06
      %v834 = vadd.f32 %v804, 4e-06
      %v835 = vadd.f32 %v805, 4e-06
      %v836 = vadd.f32 %v806, 4e-06
      %v837 = vadd.f32 %v807, 4e-06
      %v838 = vadd.f32 %v808, 4e-06
      %v839 = vadd.f32 %v809, 4e-06
      %v840 = vadd.f32 %v810, 4e-06
      %v841 = vadd.f32 %v811, 4e-06
      %v842 = vadd.f32 %v812, 4e-06
      %v843 = vadd.f32 %v813, 4e-06
      %v844 = vadd.f32 %v814, 4e-06
      %v845 = vadd.f32 %v815, 4e-06
      %v846 = vadd.f32 %v816, 4e-06
      %v847 = vadd.f32 %v817, 4e-06
      %v848 = vadd.f32 %v818, 4e-06
      %v849 = vrsqrt.pop %v819
      %v850 = vmul.f32 %v819, %v849
      %vm851 = vcmp.eq.f32.partialorder %v819, inf
      %v852 = vsel %vm851, %v819, %v850
      %vm853 = vcmp.eq.f32.partialorder %v819, 0.0
      %v854 = vand.u32 %v819, 2147483648
      %v855 = vsel %vm853, %v854, %v852
      %v856 = vrsqrt.pop %v820
      %v857 = vmul.f32 %v820, %v856
      %vm858 = vcmp.eq.f32.partialorder %v820, inf
      %v859 = vsel %vm858, %v820, %v857
      %vm860 = vcmp.eq.f32.partialorder %v820, 0.0
      %v861 = vand.u32 %v820, 2147483648
      %v862 = vsel %vm860, %v861, %v859
      %v863 = vrsqrt.pop %v821
      %v864 = vmul.f32 %v821, %v863
      %vm865 = vcmp.eq.f32.partialorder %v821, inf
      %v866 = vsel %vm865, %v821, %v864
      %vm867 = vcmp.eq.f32.partialorder %v821, 0.0
      %v868 = vand.u32 %v821, 2147483648
      %v869 = vsel %vm867, %v868, %v866
      %v870 = vrsqrt.pop %v822
      %v871 = vmul.f32 %v822, %v870
      %vm872 = vcmp.eq.f32.partialorder %v822, inf
      %v873 = vsel %vm872, %v822, %v871
      %vm874 = vcmp.eq.f32.partialorder %v822, 0.0
      %v875 = vand.u32 %v822, 2147483648
      %v876 = vsel %vm874, %v875, %v873
      %v877 = vrsqrt.pop %v823
      %v878 = vmul.f32 %v823, %v877
      %vm879 = vcmp.eq.f32.partialorder %v823, inf
      %v880 = vsel %vm879, %v823, %v878
      %vm881 = vcmp.eq.f32.partialorder %v823, 0.0
      %v882 = vand.u32 %v823, 2147483648
      %v883 = vsel %vm881, %v882, %v880
      %v884 = vrsqrt.pop %v824
      %v885 = vmul.f32 %v824, %v884
      %vm886 = vcmp.eq.f32.partialorder %v824, inf
      %v887 = vsel %vm886, %v824, %v885
      %vm888 = vcmp.eq.f32.partialorder %v824, 0.0
      %v889 = vand.u32 %v824, 2147483648
      %v890 = vsel %vm888, %v889, %v887
      %v891 = vrsqrt.pop %v825
      %v892 = vmul.f32 %v825, %v891
      %vm893 = vcmp.eq.f32.partialorder %v825, inf
      %v894 = vsel %vm893, %v825, %v892
      %vm895 = vcmp.eq.f32.partialorder %v825, 0.0
      %v896 = vand.u32 %v825, 2147483648
      %v897 = vsel %vm895, %v896, %v894
      %v898 = vrsqrt.pop %v826
      %v899 = vmul.f32 %v826, %v898
      %vm900 = vcmp.eq.f32.partialorder %v826, inf
      %v901 = vsel %vm900, %v826, %v899
      %vm902 = vcmp.eq.f32.partialorder %v826, 0.0
      %v903 = vand.u32 %v826, 2147483648
      %v904 = vsel %vm902, %v903, %v901
      %v905 = vrsqrt.pop %v827
      %v906 = vmul.f32 %v827, %v905
      %vm907 = vcmp.eq.f32.partialorder %v827, inf
      %v908 = vsel %vm907, %v827, %v906
      %vm909 = vcmp.eq.f32.partialorder %v827, 0.0
      %v910 = vand.u32 %v827, 2147483648
      %v911 = vsel %vm909, %v910, %v908
      %v912 = vrsqrt.pop %v828
      %v913 = vmul.f32 %v828, %v912
      %vm914 = vcmp.eq.f32.partialorder %v828, inf
      %v915 = vsel %vm914, %v828, %v913
      %vm916 = vcmp.eq.f32.partialorder %v828, 0.0
      %v917 = vand.u32 %v828, 2147483648
      %v918 = vsel %vm916, %v917, %v915
      %v919 = vrsqrt.pop %v829
      %v920 = vmul.f32 %v829, %v919
      %vm921 = vcmp.eq.f32.partialorder %v829, inf
      %v922 = vsel %vm921, %v829, %v920
      %vm923 = vcmp.eq.f32.partialorder %v829, 0.0
      %v924 = vand.u32 %v829, 2147483648
      %v925 = vsel %vm923, %v924, %v922
      %v926 = vrsqrt.pop %v830
      %v927 = vmul.f32 %v830, %v926
      %vm928 = vcmp.eq.f32.partialorder %v830, inf
      %v929 = vsel %vm928, %v830, %v927
      %vm930 = vcmp.eq.f32.partialorder %v830, 0.0
      %v931 = vand.u32 %v830, 2147483648
      %v932 = vsel %vm930, %v931, %v929
      %v933 = vrsqrt.pop %v831
      %v934 = vmul.f32 %v831, %v933
      %vm935 = vcmp.eq.f32.partialorder %v831, inf
      %v936 = vsel %vm935, %v831, %v934
      %vm937 = vcmp.eq.f32.partialorder %v831, 0.0
      %v938 = vand.u32 %v831, 2147483648
      %v939 = vsel %vm937, %v938, %v936
      %v940 = vrsqrt.pop %v832
      %v941 = vmul.f32 %v832, %v940
      %vm942 = vcmp.eq.f32.partialorder %v832, inf
      %v943 = vsel %vm942, %v832, %v941
      %vm944 = vcmp.eq.f32.partialorder %v832, 0.0
      %v945 = vand.u32 %v832, 2147483648
      %v946 = vsel %vm944, %v945, %v943
      %v947 = vrsqrt.pop %v833
      %v948 = vmul.f32 %v833, %v947
      %vm949 = vcmp.eq.f32.partialorder %v833, inf
      %v950 = vsel %vm949, %v833, %v948
      %vm951 = vcmp.eq.f32.partialorder %v833, 0.0
      %v952 = vand.u32 %v833, 2147483648
      %v953 = vsel %vm951, %v952, %v950
      %v954 = vrsqrt.pop %v834
      %v955 = vmul.f32 %v834, %v954
      %vm956 = vcmp.eq.f32.partialorder %v834, inf
      %v957 = vsel %vm956, %v834, %v955
      %vm958 = vcmp.eq.f32.partialorder %v834, 0.0
      %v959 = vand.u32 %v834, 2147483648
      %v960 = vsel %vm958, %v959, %v957
      %v961 = vrsqrt.pop %v835
      %v962 = vmul.f32 %v835, %v961
      %vm963 = vcmp.eq.f32.partialorder %v835, inf
      %v964 = vsel %vm963, %v835, %v962
      %vm965 = vcmp.eq.f32.partialorder %v835, 0.0
      %v966 = vand.u32 %v835, 2147483648
      %v967 = vsel %vm965, %v966, %v964
      %v968 = vrsqrt.pop %v836
      %v969 = vmul.f32 %v836, %v968
      %vm970 = vcmp.eq.f32.partialorder %v836, inf
      %v971 = vsel %vm970, %v836, %v969
      %vm972 = vcmp.eq.f32.partialorder %v836, 0.0
      %v973 = vand.u32 %v836, 2147483648
      %v974 = vsel %vm972, %v973, %v971
      %v975 = vrsqrt.pop %v837
      %v976 = vmul.f32 %v837, %v975
      %vm977 = vcmp.eq.f32.partialorder %v837, inf
      %v978 = vsel %vm977, %v837, %v976
      %vm979 = vcmp.eq.f32.partialorder %v837, 0.0
      %v980 = vand.u32 %v837, 2147483648
      %v981 = vsel %vm979, %v980, %v978
      %v982 = vrsqrt.pop %v838
      %v983 = vmul.f32 %v838, %v982
      %vm984 = vcmp.eq.f32.partialorder %v838, inf
      %v985 = vsel %vm984, %v838, %v983
      %vm986 = vcmp.eq.f32.partialorder %v838, 0.0
      %v987 = vand.u32 %v838, 2147483648
      %v988 = vsel %vm986, %v987, %v985
      %v989 = vrsqrt.pop %v839
      %v990 = vmul.f32 %v839, %v989
      %vm991 = vcmp.eq.f32.partialorder %v839, inf
      %v992 = vsel %vm991, %v839, %v990
      %vm993 = vcmp.eq.f32.partialorder %v839, 0.0
      %v994 = vand.u32 %v839, 2147483648
      %v995 = vsel %vm993, %v994, %v992
      %v996 = vrsqrt.pop %v840
      %v997 = vmul.f32 %v840, %v996
      %vm998 = vcmp.eq.f32.partialorder %v840, inf
      %v999 = vsel %vm998, %v840, %v997
      %vm1000 = vcmp.eq.f32.partialorder %v840, 0.0
      %v1001 = vand.u32 %v840, 2147483648
      %v1002 = vsel %vm1000, %v1001, %v999
      %v1003 = vrsqrt.pop %v841
      %v1004 = vmul.f32 %v841, %v1003
      %vm1005 = vcmp.eq.f32.partialorder %v841, inf
      %v1006 = vsel %vm1005, %v841, %v1004
      %vm1007 = vcmp.eq.f32.partialorder %v841, 0.0
      %v1008 = vand.u32 %v841, 2147483648
      %v1009 = vsel %vm1007, %v1008, %v1006
      %v1010 = vrsqrt.pop %v842
      %v1011 = vmul.f32 %v842, %v1010
      %vm1012 = vcmp.eq.f32.partialorder %v842, inf
      %v1013 = vsel %vm1012, %v842, %v1011
      %vm1014 = vcmp.eq.f32.partialorder %v842, 0.0
      %v1015 = vand.u32 %v842, 2147483648
      %v1016 = vsel %vm1014, %v1015, %v1013
      %v1017 = vrsqrt.pop %v843
      %v1018 = vmul.f32 %v843, %v1017
      %vm1019 = vcmp.eq.f32.partialorder %v843, inf
      %v1020 = vsel %vm1019, %v843, %v1018
      %vm1021 = vcmp.eq.f32.partialorder %v843, 0.0
      %v1022 = vand.u32 %v843, 2147483648
      %v1023 = vsel %vm1021, %v1022, %v1020
      %v1024 = vrsqrt.pop %v844
      %v1025 = vmul.f32 %v844, %v1024
      %vm1026 = vcmp.eq.f32.partialorder %v844, inf
      %v1027 = vsel %vm1026, %v844, %v1025
      %vm1028 = vcmp.eq.f32.partialorder %v844, 0.0
      %v1029 = vand.u32 %v844, 2147483648
      %v1030 = vsel %vm1028, %v1029, %v1027
      %v1031 = vrsqrt.pop %v845
      %v1032 = vmul.f32 %v845, %v1031
      %vm1033 = vcmp.eq.f32.partialorder %v845, inf
      %v1034 = vsel %vm1033, %v845, %v1032
      %vm1035 = vcmp.eq.f32.partialorder %v845, 0.0
      %v1036 = vand.u32 %v845, 2147483648
      %v1037 = vsel %vm1035, %v1036, %v1034
      %v1038 = vrsqrt.pop %v846
      %v1039 = vmul.f32 %v846, %v1038
      %vm1040 = vcmp.eq.f32.partialorder %v846, inf
      %v1041 = vsel %vm1040, %v846, %v1039
      %vm1042 = vcmp.eq.f32.partialorder %v846, 0.0
      %v1043 = vand.u32 %v846, 2147483648
      %v1044 = vsel %vm1042, %v1043, %v1041
      %v1045 = vrsqrt.pop %v847
      %v1046 = vmul.f32 %v847, %v1045
      %vm1047 = vcmp.eq.f32.partialorder %v847, inf
      %v1048 = vsel %vm1047, %v847, %v1046
      %vm1049 = vcmp.eq.f32.partialorder %v847, 0.0
      %v1050 = vand.u32 %v847, 2147483648
      %v1051 = vsel %vm1049, %v1050, %v1048
      %v1052 = vrsqrt.pop %v848
      %v1053 = vmul.f32 %v848, %v1052
      %vm1054 = vcmp.eq.f32.partialorder %v848, inf
      %v1055 = vsel %vm1054, %v848, %v1053
      %vm1056 = vcmp.eq.f32.partialorder %v848, 0.0
      %v1057 = vand.u32 %v848, 2147483648
      %v1058 = vsel %vm1056, %v1057, %v1055
      %v1059 = vsub.f32 0.0, %v855
      %v1060 = vsub.f32 0.0, %v862
      %v1061 = vsub.f32 0.0, %v869
      %v1062 = vsub.f32 0.0, %v876
      %v1063 = vsub.f32 0.0, %v883
      %v1064 = vsub.f32 0.0, %v890
      %v1065 = vsub.f32 0.0, %v897
      %v1066 = vsub.f32 0.0, %v904
      %v1067 = vsub.f32 0.0, %v911
      %v1068 = vsub.f32 0.0, %v918
      %v1069 = vsub.f32 0.0, %v925
      %v1070 = vsub.f32 0.0, %v932
      %v1071 = vsub.f32 0.0, %v939
      %v1072 = vsub.f32 0.0, %v946
      %v1073 = vsub.f32 0.0, %v953
      %v1074 = vsub.f32 0.0, %v960
      %v1075 = vsub.f32 0.0, %v967
      %v1076 = vsub.f32 0.0, %v974
      %v1077 = vsub.f32 0.0, %v981
      %v1078 = vsub.f32 0.0, %v988
      %v1079 = vsub.f32 0.0, %v995
      %v1080 = vsub.f32 0.0, %v1002
      %v1081 = vsub.f32 0.0, %v1009
      %v1082 = vsub.f32 0.0, %v1016
      %v1083 = vsub.f32 0.0, %v1023
      %v1084 = vsub.f32 0.0, %v1030
      %v1085 = vsub.f32 0.0, %v1037
      %v1086 = vsub.f32 0.0, %v1044
      %v1087 = vsub.f32 0.0, %v1051
      %v1088 = vsub.f32 0.0, %v1058
      %v1089 = vmax.f32 %v1059, %v1069
      %v1090 = vsel %vm353, %v1079, -inf
      %v1091 = vmax.f32 %v1089, %v1090
      %v1092 = vrot.slane %v1091, 4
      %v1093 = vmax.f32 %v1091, %v1092
      %v1094 = vrot.slane %v1093, 2
      %v1095 = vmax.f32 %v1093, %v1094
      %v1096 = vrot.slane %v1095, 1
      %v1097 = vmax.f32 %v1095, %v1096
      %v1098 = vmax.f32 %v1060, %v1070
      %v1099 = vsel %vm353, %v1080, -inf
      %v1100 = vmax.f32 %v1098, %v1099
      %v1101 = vrot.slane %v1100, 4
      %v1102 = vmax.f32 %v1100, %v1101
      %v1103 = vrot.slane %v1102, 2
      %v1104 = vmax.f32 %v1102, %v1103
      %v1105 = vrot.slane %v1104, 1
      %v1106 = vmax.f32 %v1104, %v1105
      %v1107 = vmax.f32 %v1061, %v1071
      %v1108 = vsel %vm353, %v1081, -inf
      %v1109 = vmax.f32 %v1107, %v1108
      %v1110 = vrot.slane %v1109, 4
      %v1111 = vmax.f32 %v1109, %v1110
      %v1112 = vrot.slane %v1111, 2
      %v1113 = vmax.f32 %v1111, %v1112
      %v1114 = vrot.slane %v1113, 1
      %v1115 = vmax.f32 %v1113, %v1114
      %v1116 = vmax.f32 %v1062, %v1072
      %v1117 = vsel %vm353, %v1082, -inf
      %v1118 = vmax.f32 %v1116, %v1117
      %v1119 = vrot.slane %v1118, 4
      %v1120 = vmax.f32 %v1118, %v1119
      %v1121 = vrot.slane %v1120, 2
      %v1122 = vmax.f32 %v1120, %v1121
      %v1123 = vrot.slane %v1122, 1
      %v1124 = vmax.f32 %v1122, %v1123
      %v1125 = vmax.f32 %v1063, %v1073
      %v1126 = vsel %vm353, %v1083, -inf
      %v1127 = vmax.f32 %v1125, %v1126
      %v1128 = vrot.slane %v1127, 4
      %v1129 = vmax.f32 %v1127, %v1128
      %v1130 = vrot.slane %v1129, 2
      %v1131 = vmax.f32 %v1129, %v1130
      %v1132 = vrot.slane %v1131, 1
      %v1133 = vmax.f32 %v1131, %v1132
      %v1134 = vmax.f32 %v1064, %v1074
      %v1135 = vsel %vm353, %v1084, -inf
      %v1136 = vmax.f32 %v1134, %v1135
      %v1137 = vrot.slane %v1136, 4
      %v1138 = vmax.f32 %v1136, %v1137
      %v1139 = vrot.slane %v1138, 2
      %v1140 = vmax.f32 %v1138, %v1139
      %v1141 = vrot.slane %v1140, 1
      %v1142 = vmax.f32 %v1140, %v1141
      %v1143 = vmax.f32 %v1065, %v1075
      %v1144 = vsel %vm353, %v1085, -inf
      %v1145 = vmax.f32 %v1143, %v1144
      %v1146 = vrot.slane %v1145, 4
      %v1147 = vmax.f32 %v1145, %v1146
      %v1148 = vrot.slane %v1147, 2
      %v1149 = vmax.f32 %v1147, %v1148
      %v1150 = vrot.slane %v1149, 1
      %v1151 = vmax.f32 %v1149, %v1150
      %v1152 = vmax.f32 %v1066, %v1076
      %v1153 = vsel %vm353, %v1086, -inf
      %v1154 = vmax.f32 %v1152, %v1153
      %v1155 = vrot.slane %v1154, 4
      %v1156 = vmax.f32 %v1154, %v1155
      %v1157 = vrot.slane %v1156, 2
      %v1158 = vmax.f32 %v1156, %v1157
      %v1159 = vrot.slane %v1158, 1
      %v1160 = vmax.f32 %v1158, %v1159
      %v1161 = vmax.f32 %v1067, %v1077
      %v1162 = vsel %vm353, %v1087, -inf
      %v1163 = vmax.f32 %v1161, %v1162
      %v1164 = vrot.slane %v1163, 4
      %v1165 = vmax.f32 %v1163, %v1164
      %v1166 = vrot.slane %v1165, 2
      %v1167 = vmax.f32 %v1165, %v1166
      %v1168 = vrot.slane %v1167, 1
      %v1169 = vmax.f32 %v1167, %v1168
      %v1170 = vmax.f32 %v1068, %v1078
      %v1171 = vsel %vm353, %v1088, -inf
      %v1172 = vmax.f32 %v1170, %v1171
      %v1173 = vrot.slane %v1172, 4
      %v1174 = vmax.f32 %v1172, %v1173
      %v1175 = vrot.slane %v1174, 2
      %v1176 = vmax.f32 %v1174, %v1175
      %v1177 = vrot.slane %v1176, 1
      %v1178 = vmax.f32 %v1176, %v1177
      %v1179 = vsub.f32 %v1059, %v1097
      %v1180 = vsub.f32 %v1060, %v1106
      %v1181 = vsub.f32 %v1061, %v1115
      %v1182 = vsub.f32 %v1062, %v1124
      %v1183 = vsub.f32 %v1063, %v1133
      %v1184 = vsub.f32 %v1064, %v1142
      %v1185 = vsub.f32 %v1065, %v1151
      %v1186 = vsub.f32 %v1066, %v1160
      %v1187 = vsub.f32 %v1067, %v1169
      %v1188 = vsub.f32 %v1068, %v1178
      %v1189 = vsub.f32 %v1069, %v1097
      %v1190 = vsub.f32 %v1070, %v1106
      %v1191 = vsub.f32 %v1071, %v1115
      %v1192 = vsub.f32 %v1072, %v1124
      %v1193 = vsub.f32 %v1073, %v1133
      %v1194 = vsub.f32 %v1074, %v1142
      %v1195 = vsub.f32 %v1075, %v1151
      %v1196 = vsub.f32 %v1076, %v1160
      %v1197 = vsub.f32 %v1077, %v1169
      %v1198 = vsub.f32 %v1078, %v1178
      %v1199 = vsub.f32 %v1079, %v1097
      %v1200 = vsub.f32 %v1080, %v1106
      %v1201 = vsub.f32 %v1081, %v1115
      %v1202 = vsub.f32 %v1082, %v1124
      %v1203 = vsub.f32 %v1083, %v1133
      %v1204 = vsub.f32 %v1084, %v1142
      %v1205 = vsub.f32 %v1085, %v1151
      %v1206 = vsub.f32 %v1086, %v1160
      %v1207 = vsub.f32 %v1087, %v1169
      %v1208 = vsub.f32 %v1088, %v1178
      %v1209 = vpack.c.bf16 %v1189, %v1179
      %v1210 = vpack.c.bf16 %v1190, %v1180
      %v1211 = vpack.c.bf16 %v1191, %v1181
      %v1212 = vpack.c.bf16 %v1192, %v1182
      %v1213 = vpack.c.bf16 %v1193, %v1183
      %v1214 = vpack.c.bf16 %v1194, %v1184
      %v1215 = vpack.c.bf16 %v1195, %v1185
      %v1216 = vpack.c.bf16 %v1196, %v1186
      %v1217 = vpack.c.bf16 %v1197, %v1187
      %v1218 = vpack.c.bf16 %v1198, %v1188
      %v1219 = vpack.c.bf16 %v1199, %v1199
      %v1220 = vpack.c.bf16 %v1200, %v1200
      %v1221 = vpack.c.bf16 %v1201, %v1201
      %v1222 = vpack.c.bf16 %v1202, %v1202
      %v1223 = vpack.c.bf16 %v1203, %v1203
      %v1224 = vpack.c.bf16 %v1204, %v1204
      %v1225 = vpack.c.bf16 %v1205, %v1205
      %v1226 = vpack.c.bf16 %v1206, %v1206
      %v1227 = vpack.c.bf16 %v1207, %v1207
      %v1228 = vpack.c.bf16 %v1208, %v1208
      %v1230 = vmul.bf16 %v1209, 1069105081
      %v1231 = vpow.bf16.pop %v1230
      %v1233 = vmul.bf16 %v1210, 1069105081
      %v1234 = vpow.bf16.pop %v1233
      %v1236 = vmul.bf16 %v1211, 1069105081
      %v1237 = vpow.bf16.pop %v1236
      %v1239 = vmul.bf16 %v1212, 1069105081
      %v1240 = vpow.bf16.pop %v1239
      %v1242 = vmul.bf16 %v1213, 1069105081
      %v1243 = vpow.bf16.pop %v1242
      %v1245 = vmul.bf16 %v1214, 1069105081
      %v1246 = vpow.bf16.pop %v1245
      %v1248 = vmul.bf16 %v1215, 1069105081
      %v1249 = vpow.bf16.pop %v1248
      %v1251 = vmul.bf16 %v1216, 1069105081
      %v1252 = vpow.bf16.pop %v1251
      %v1254 = vmul.bf16 %v1217, 1069105081
      %v1255 = vpow.bf16.pop %v1254
      %v1257 = vmul.bf16 %v1218, 1069105081
      %v1258 = vpow.bf16.pop %v1257
      %v1260 = vmul.bf16 %v1219, 1069105081
      %v1261 = vpow.bf16.pop %v1260
      %v1263 = vmul.bf16 %v1220, 1069105081
      %v1264 = vpow.bf16.pop %v1263
      %v1266 = vmul.bf16 %v1221, 1069105081
      %v1267 = vpow.bf16.pop %v1266
      %v1269 = vmul.bf16 %v1222, 1069105081
      %v1270 = vpow.bf16.pop %v1269
      %v1272 = vmul.bf16 %v1223, 1069105081
      %v1273 = vpow.bf16.pop %v1272
      %v1275 = vmul.bf16 %v1224, 1069105081
      %v1276 = vpow.bf16.pop %v1275
      %v1278 = vmul.bf16 %v1225, 1069105081
      %v1279 = vpow.bf16.pop %v1278
      %v1281 = vmul.bf16 %v1226, 1069105081
      %v1282 = vpow.bf16.pop %v1281
      %v1284 = vmul.bf16 %v1227, 1069105081
      %v1285 = vpow.bf16.pop %v1284
      %v1287 = vmul.bf16 %v1228, 1069105081
      %v1288 = vpow.bf16.pop %v1287
      %v1289 = vld [vmem:[%s1] sm:$0xff]
      %v1290 = vld [vmem:[%s1 + $0x8] sm:$0x1f]
      %v1291 = vpack.c.bf16 %v1290, %v1289
      %vm1292 = vcmask 162816
      %v1294 = vsel %vm1292, %v1291, 0
      %vm1296 = vcmask 1041408
      %v1298 = vsel %vm1296, %v1261, 0
      %v1301 = vsel %vm1296, %v1264, 0
      %v1304 = vsel %vm1296, %v1267, 0
      %v1307 = vsel %vm1296, %v1270, 0
      %v1310 = vsel %vm1296, %v1273, 0
      %v1313 = vsel %vm1296, %v1276, 0
      %v1316 = vsel %vm1296, %v1279, 0
      %v1319 = vsel %vm1296, %v1282, 0
      %v1322 = vsel %vm1296, %v1285, 0
      %v1325 = vsel %vm1296, %v1288, 0
      %1327 = vmatprep.subr.bf16.mxu0 %v1234
      %1328 = vmatpush1.bf16.msra.mxu0 %v1231
      %1329 = vmatprep.subr.bf16.mxu0 %v1301
      %1330 = vmatpush1.bf16.msra.mxu0 %v1298
      %1331 = vmatprep.subr.bf16.mxu0 0
      %1332 = vmatpush1.bf16.msra.mxu0 0
      %1333 = vmatprep.subr.bf16.mxu0 0
      %1334 = vmatpush1.bf16.msra.mxu0 0
      %1335 = vmatprep.subr.bf16.mxu0 0
      %1336 = vmatpush1.bf16.msra.mxu0 0
      %1337 = vmatprep.subr.bf16.mxu0 0
      %1338 = vmatpush1.bf16.msra.mxu0 0
      %1339 = vmatprep.subr.bf16.mxu0 0
      %1340 = vmatpush1.bf16.msra.mxu0 0
      %1341 = vmatprep.subr.bf16.mxu0 0
      %1342 = vmatpush1.bf16.msra.mxu0 0
      %1343 = vmatprep.subr.bf16.mxu0 0
      %1344 = vmatpush1.bf16.msra.mxu0 0
      %1345 = vmatprep.subr.bf16.mxu0 0
      %1346 = vmatpush1.bf16.msra.mxu0 0
      %1347 = vmatprep.subr.bf16.mxu0 0
      %1348 = vmatpush1.bf16.msra.mxu0 0
      %1349 = vmatprep.subr.bf16.mxu0 0
      %1350 = vmatpush1.bf16.msra.mxu0 0
      %1351 = vmatprep.subr.bf16.mxu0 0
      %1352 = vmatpush1.bf16.msra.mxu0 0
      %1353 = vmatprep.subr.bf16.mxu0 0
      %1354 = vmatpush1.bf16.msra.mxu0 0
      %1355 = vmatprep.subr.bf16.mxu0 0
      %1356 = vmatpush1.bf16.msra.mxu0 0
      %1357 = vmatprep.subr.bf16.mxu0 0
      %1358 = vmatpush1.bf16.msra.mxu0 0
      %1359 = vmatprep.mubr.bf16.mxu0 0
      %1360 = vmatmul.mubr.bf16.gmra.mrb[0].mxu0 %v1294
      %v1361 = vpop.f32.mrb[0].mxu0
      %v1362 = vadd.f32 0.0, %v1361
      %v1363 = vpop.f32.mrb[0].mxu0
      %v1364 = vadd.f32 0.0, %v1363
      %v1365 = vpop.f32.mrb[0].mxu0
      %v1366 = vadd.f32 0.0, %v1365
      %v1367 = vpop.f32.mrb[0].mxu0
      %v1368 = vadd.f32 0.0, %v1367
      %1369 = vdwg.mxu0
      %1370 = vmatprep.subr.bf16.mxu0 %v1240
      %1371 = vmatpush1.bf16.msra.mxu0 %v1237
      %1372 = vmatprep.subr.bf16.mxu0 %v1307
      %1373 = vmatpush1.bf16.msra.mxu0 %v1304
      %1374 = vmatprep.subr.bf16.mxu0 0
      %1375 = vmatpush1.bf16.msra.mxu0 0
      %1376 = vmatprep.subr.bf16.mxu0 0
      %1377 = vmatpush1.bf16.msra.mxu0 0
      %1378 = vmatprep.subr.bf16.mxu0 0
      %1379 = vmatpush1.bf16.msra.mxu0 0
      %1380 = vmatprep.subr.bf16.mxu0 0
      %1381 = vmatpush1.bf16.msra.mxu0 0
      %1382 = vmatprep.subr.bf16.mxu0 0
      %1383 = vmatpush1.bf16.msra.mxu0 0
      %1384 = vmatprep.subr.bf16.mxu0 0
      %1385 = vmatpush1.bf16.msra.mxu0 0
      %1386 = vmatprep.subr.bf16.mxu0 0
      %1387 = vmatpush1.bf16.msra.mxu0 0
      %1388 = vmatprep.subr.bf16.mxu0 0
      %1389 = vmatpush1.bf16.msra.mxu0 0
      %1390 = vmatprep.subr.bf16.mxu0 0
      %1391 = vmatpush1.bf16.msra.mxu0 0
      %1392 = vmatprep.subr.bf16.mxu0 0
      %1393 = vmatpush1.bf16.msra.mxu0 0
      %1394 = vmatprep.subr.bf16.mxu0 0
      %1395 = vmatpush1.bf16.msra.mxu0 0
      %1396 = vmatprep.subr.bf16.mxu0 0
      %1397 = vmatpush1.bf16.msra.mxu0 0
      %1398 = vmatprep.subr.bf16.mxu0 0
      %1399 = vmatpush1.bf16.msra.mxu0 0
      %1400 = vmatprep.subr.bf16.mxu0 0
      %1401 = vmatpush1.bf16.msra.mxu0 0
      %1402 = vmatprep.mubr.bf16.mxu0 0
      %1403 = vmatmul.mubr.bf16.gmra.mrb[0].mxu0 %v1294
      %v1404 = vpop.f32.mrb[0].mxu0
      %v1405 = vadd.f32 0.0, %v1404
      %v1406 = vpop.f32.mrb[0].mxu0
      %v1407 = vadd.f32 0.0, %v1406
      %v1408 = vpop.f32.mrb[0].mxu0
      %v1409 = vadd.f32 0.0, %v1408
      %v1410 = vpop.f32.mrb[0].mxu0
      %v1411 = vadd.f32 0.0, %v1410
      %1412 = vdwg.mxu0
      %1413 = vmatprep.subr.bf16.mxu0 %v1246
      %1414 = vmatpush1.bf16.msra.mxu0 %v1243
      %1415 = vmatprep.subr.bf16.mxu0 %v1313
      %1416 = vmatpush1.bf16.msra.mxu0 %v1310
      %1417 = vmatprep.subr.bf16.mxu0 0
      %1418 = vmatpush1.bf16.msra.mxu0 0
      %1419 = vmatprep.subr.bf16.mxu0 0
      %1420 = vmatpush1.bf16.msra.mxu0 0
      %1421 = vmatprep.subr.bf16.mxu0 0
      %1422 = vmatpush1.bf16.msra.mxu0 0
      %1423 = vmatprep.subr.bf16.mxu0 0
      %1424 = vmatpush1.bf16.msra.mxu0 0
      %1425 = vmatprep.subr.bf16.mxu0 0
      %1426 = vmatpush1.bf16.msra.mxu0 0
      %1427 = vmatprep.subr.bf16.mxu0 0
      %1428 = vmatpush1.bf16.msra.mxu0 0
      %1429 = vmatprep.subr.bf16.mxu0 0
      %1430 = vmatpush1.bf16.msra.mxu0 0
      %1431 = vmatprep.subr.bf16.mxu0 0
      %1432 = vmatpush1.bf16.msra.mxu0 0
      %1433 = vmatprep.subr.bf16.mxu0 0
      %1434 = vmatpush1.bf16.msra.mxu0 0
      %1435 = vmatprep.subr.bf16.mxu0 0
      %1436 = vmatpush1.bf16.msra.mxu0 0
      %1437 = vmatprep.subr.bf16.mxu0 0
      %1438 = vmatpush1.bf16.msra.mxu0 0
      %1439 = vmatprep.subr.bf16.mxu0 0
      %1440 = vmatpush1.bf16.msra.mxu0 0
      %1441 = vmatprep.subr.bf16.mxu0 0
      %1442 = vmatpush1.bf16.msra.mxu0 0
      %1443 = vmatprep.subr.bf16.mxu0 0
      %1444 = vmatpush1.bf16.msra.mxu0 0
      %1445 = vmatprep.mubr.bf16.mxu0 0
      %1446 = vmatmul.mubr.bf16.gmra.mrb[0].mxu0 %v1294
      %v1447 = vpop.f32.mrb[0].mxu0
      %v1448 = vadd.f32 0.0, %v1447
      %v1449 = vpop.f32.mrb[0].mxu0
      %v1450 = vadd.f32 0.0, %v1449
      %v1451 = vpop.f32.mrb[0].mxu0
      %v1452 = vadd.f32 0.0, %v1451
      %v1453 = vpop.f32.mrb[0].mxu0
      %v1454 = vadd.f32 0.0, %v1453
      %1455 = vdwg.mxu0
      %1456 = vmatprep.subr.bf16.mxu0 %v1252
      %1457 = vmatpush1.bf16.msra.mxu0 %v1249
      %1458 = vmatprep.subr.bf16.mxu0 %v1319
      %1459 = vmatpush1.bf16.msra.mxu0 %v1316
      %1460 = vmatprep.subr.bf16.mxu0 0
      %1461 = vmatpush1.bf16.msra.mxu0 0
      %1462 = vmatprep.subr.bf16.mxu0 0
      %1463 = vmatpush1.bf16.msra.mxu0 0
      %1464 = vmatprep.subr.bf16.mxu0 0
      %1465 = vmatpush1.bf16.msra.mxu0 0
      %1466 = vmatprep.subr.bf16.mxu0 0
      %1467 = vmatpush1.bf16.msra.mxu0 0
      %1468 = vmatprep.subr.bf16.mxu0 0
      %1469 = vmatpush1.bf16.msra.mxu0 0
      %1470 = vmatprep.subr.bf16.mxu0 0
      %1471 = vmatpush1.bf16.msra.mxu0 0
      %1472 = vmatprep.subr.bf16.mxu0 0
      %1473 = vmatpush1.bf16.msra.mxu0 0
      %1474 = vmatprep.subr.bf16.mxu0 0
      %1475 = vmatpush1.bf16.msra.mxu0 0
      %1476 = vmatprep.subr.bf16.mxu0 0
      %1477 = vmatpush1.bf16.msra.mxu0 0
      %1478 = vmatprep.subr.bf16.mxu0 0
      %1479 = vmatpush1.bf16.msra.mxu0 0
      %1480 = vmatprep.subr.bf16.mxu0 0
      %1481 = vmatpush1.bf16.msra.mxu0 0
      %1482 = vmatprep.subr.bf16.mxu0 0
      %1483 = vmatpush1.bf16.msra.mxu0 0
      %1484 = vmatprep.subr.bf16.mxu0 0
      %1485 = vmatpush1.bf16.msra.mxu0 0
      %1486 = vmatprep.subr.bf16.mxu0 0
      %1487 = vmatpush1.bf16.msra.mxu0 0
      %1488 = vmatprep.mubr.bf16.mxu0 0
      %1489 = vmatmul.mubr.bf16.gmra.mrb[0].mxu0 %v1294
      %v1490 = vpop.f32.mrb[0].mxu0
      %v1491 = vadd.f32 0.0, %v1490
      %v1492 = vpop.f32.mrb[0].mxu0
      %v1493 = vadd.f32 0.0, %v1492
      %v1494 = vpop.f32.mrb[0].mxu0
      %v1495 = vadd.f32 0.0, %v1494
      %v1496 = vpop.f32.mrb[0].mxu0
      %v1497 = vadd.f32 0.0, %v1496
      %1498 = vdwg.mxu0
      %1499 = vmatprep.subr.bf16.mxu0 %v1258
      %1500 = vmatpush1.bf16.msra.mxu0 %v1255
      %1501 = vmatprep.subr.bf16.mxu0 %v1325
      %1502 = vmatpush1.bf16.msra.mxu0 %v1322
      %1503 = vmatprep.subr.bf16.mxu0 0
      %1504 = vmatpush1.bf16.msra.mxu0 0
      %1505 = vmatprep.subr.bf16.mxu0 0
      %1506 = vmatpush1.bf16.msra.mxu0 0
      %1507 = vmatprep.subr.bf16.mxu0 0
      %1508 = vmatpush1.bf16.msra.mxu0 0
      %1509 = vmatprep.subr.bf16.mxu0 0
      %1510 = vmatpush1.bf16.msra.mxu0 0
      %1511 = vmatprep.subr.bf16.mxu0 0
      %1512 = vmatpush1.bf16.msra.mxu0 0
      %1513 = vmatprep.subr.bf16.mxu0 0
      %1514 = vmatpush1.bf16.msra.mxu0 0
      %1515 = vmatprep.subr.bf16.mxu0 0
      %1516 = vmatpush1.bf16.msra.mxu0 0
      %1517 = vmatprep.subr.bf16.mxu0 0
      %1518 = vmatpush1.bf16.msra.mxu0 0
      %1519 = vmatprep.subr.bf16.mxu0 0
      %1520 = vmatpush1.bf16.msra.mxu0 0
      %1521 = vmatprep.subr.bf16.mxu0 0
      %1522 = vmatpush1.bf16.msra.mxu0 0
      %1523 = vmatprep.subr.bf16.mxu0 0
      %1524 = vmatpush1.bf16.msra.mxu0 0
      %1525 = vmatprep.subr.bf16.mxu0 0
      %1526 = vmatpush1.bf16.msra.mxu0 0
      %1527 = vmatprep.subr.bf16.mxu0 0
      %1528 = vmatpush1.bf16.msra.mxu0 0
      %1529 = vmatprep.subr.bf16.mxu0 0
      %1530 = vmatpush1.bf16.msra.mxu0 0
      %1531 = vmatprep.mubr.bf16.mxu0 0
      %1532 = vmatmul.mubr.bf16.gmra.mrb[0].mxu0 %v1294
      %v1533 = vpop.f32.mrb[0].mxu0
      %v1534 = vadd.f32 0.0, %v1533
      %v1535 = vpop.f32.mrb[0].mxu0
      %v1536 = vadd.f32 0.0, %v1535
      %v1537 = vpop.f32.mrb[0].mxu0
      %v1538 = vadd.f32 0.0, %v1537
      %v1539 = vpop.f32.mrb[0].mxu0
      %v1540 = vadd.f32 0.0, %v1539
      %1541 = vdwg.mxu0
      %v1542 = vlaneseq
      %v1543 = vshrl.u32 %v1542, 7
      %v1544 = vsub.s32 0, %v1543
      %v1545 = vrot.slane %v175, %v1544
      %v1546 = vlaneseq
      %v1547 = vshrl.u32 %v1546, 7
      %v1548 = vsub.s32 4, %v1547
      %v1549 = vrot.slane %v175, %v1548
      %v1550 = vlaneseq
      %v1551 = vshrl.u32 %v1550, 7
      %v1552 = vsub.s32 0, %v1551
      %v1553 = vrot.slane %v176, %v1552
      %v1554 = vlaneseq
      %v1555 = vshrl.u32 %v1554, 7
      %v1556 = vsub.s32 4, %v1555
      %v1557 = vrot.slane %v176, %v1556
      %v1558 = vlaneseq
      %v1559 = vshrl.u32 %v1558, 7
      %v1560 = vsub.s32 0, %v1559
      %v1561 = vrot.slane %v177, %v1560
      %v1562 = vlaneseq
      %v1563 = vshrl.u32 %v1562, 7
      %v1564 = vsub.s32 4, %v1563
      %v1565 = vrot.slane %v177, %v1564
      %v1566 = vlaneseq
      %v1567 = vshrl.u32 %v1566, 7
      %v1568 = vsub.s32 0, %v1567
      %v1569 = vrot.slane %v178, %v1568
      %v1570 = vlaneseq
      %v1571 = vshrl.u32 %v1570, 7
      %v1572 = vsub.s32 4, %v1571
      %v1573 = vrot.slane %v178, %v1572
      %v1574 = vlaneseq
      %v1575 = vshrl.u32 %v1574, 7
      %v1576 = vsub.s32 0, %v1575
      %v1577 = vrot.slane %v179, %v1576
      %v1578 = vlaneseq
      %v1579 = vshrl.u32 %v1578, 7
      %v1580 = vsub.s32 4, %v1579
      %v1581 = vrot.slane %v179, %v1580
      %v1592 = vlaneseq
      %v1593 = vshrl.u32 %v1592, 7
      %v1594 = vsub.s32 0, %v1593
      %v1595 = vrot.slane %v1545, %v1594
      %v1596 = vlaneseq
      %v1597 = vshrl.u32 %v1596, 7
      %v1598 = vsub.s32 0, %v1597
      %v1599 = vrot.slane %v1549, %v1598
      %v1600 = vlaneseq
      %v1601 = vshrl.u32 %v1600, 7
      %v1602 = vsub.s32 0, %v1601
      %v1603 = vrot.slane %v1553, %v1602
      %v1604 = vlaneseq
      %v1605 = vshrl.u32 %v1604, 7
      %v1606 = vsub.s32 0, %v1605
      %v1607 = vrot.slane %v1557, %v1606
      %v1608 = vlaneseq
      %v1609 = vshrl.u32 %v1608, 7
      %v1610 = vsub.s32 0, %v1609
      %v1611 = vrot.slane %v1561, %v1610
      %v1612 = vlaneseq
      %v1613 = vshrl.u32 %v1612, 7
      %v1614 = vsub.s32 0, %v1613
      %v1615 = vrot.slane %v1565, %v1614
      %v1616 = vlaneseq
      %v1617 = vshrl.u32 %v1616, 7
      %v1618 = vsub.s32 0, %v1617
      %v1619 = vrot.slane %v1569, %v1618
      %v1620 = vlaneseq
      %v1621 = vshrl.u32 %v1620, 7
      %v1622 = vsub.s32 0, %v1621
      %v1623 = vrot.slane %v1573, %v1622
      %v1624 = vlaneseq
      %v1625 = vshrl.u32 %v1624, 7
      %v1626 = vsub.s32 0, %v1625
      %v1627 = vrot.slane %v1577, %v1626
      %v1628 = vlaneseq
      %v1629 = vshrl.u32 %v1628, 7
      %v1630 = vsub.s32 0, %v1629
      %v1631 = vrot.slane %v1581, %v1630
      %v1632 = vmul.f32 %v1362, %v1595
      %v1633 = vmul.f32 %v1364, %v1599
      %v1634 = vmul.f32 %v1405, %v1603
      %v1635 = vmul.f32 %v1407, %v1607
      %v1636 = vmul.f32 %v1448, %v1611
      %v1637 = vmul.f32 %v1450, %v1615
      %v1638 = vmul.f32 %v1491, %v1619
      %v1639 = vmul.f32 %v1493, %v1623
      %v1640 = vmul.f32 %v1534, %v1627
      %v1641 = vmul.f32 %v1536, %v1631
      %v1642 = vlaneseq
      %v1643 = vshrl.u32 %v1642, 7
      %v1644 = vsub.s32 1, %v1643
      %v1645 = vrot.slane %v175, %v1644
      %v1646 = vlaneseq
      %v1647 = vshrl.u32 %v1646, 7
      %v1648 = vsub.s32 5, %v1647
      %v1649 = vrot.slane %v175, %v1648
      %v1650 = vlaneseq
      %v1651 = vshrl.u32 %v1650, 7
      %v1652 = vsub.s32 1, %v1651
      %v1653 = vrot.slane %v176, %v1652
      %v1654 = vlaneseq
      %v1655 = vshrl.u32 %v1654, 7
      %v1656 = vsub.s32 5, %v1655
      %v1657 = vrot.slane %v176, %v1656
      %v1658 = vlaneseq
      %v1659 = vshrl.u32 %v1658, 7
      %v1660 = vsub.s32 1, %v1659
      %v1661 = vrot.slane %v177, %v1660
      %v1662 = vlaneseq
      %v1663 = vshrl.u32 %v1662, 7
      %v1664 = vsub.s32 5, %v1663
      %v1665 = vrot.slane %v177, %v1664
      %v1666 = vlaneseq
      %v1667 = vshrl.u32 %v1666, 7
      %v1668 = vsub.s32 1, %v1667
      %v1669 = vrot.slane %v178, %v1668
      %v1670 = vlaneseq
      %v1671 = vshrl.u32 %v1670, 7
      %v1672 = vsub.s32 5, %v1671
      %v1673 = vrot.slane %v178, %v1672
      %v1674 = vlaneseq
      %v1675 = vshrl.u32 %v1674, 7
      %v1676 = vsub.s32 1, %v1675
      %v1677 = vrot.slane %v179, %v1676
      %v1678 = vlaneseq
      %v1679 = vshrl.u32 %v1678, 7
      %v1680 = vsub.s32 5, %v1679
      %v1681 = vrot.slane %v179, %v1680
      %v1692 = vlaneseq
      %v1693 = vshrl.u32 %v1692, 7
      %v1694 = vsub.s32 1, %v1693
      %v1695 = vrot.slane %v1645, %v1694
      %v1696 = vlaneseq
      %v1697 = vshrl.u32 %v1696, 7
      %v1698 = vsub.s32 1, %v1697
      %v1699 = vrot.slane %v1649, %v1698
      %v1700 = vlaneseq
      %v1701 = vshrl.u32 %v1700, 7
      %v1702 = vsub.s32 1, %v1701
      %v1703 = vrot.slane %v1653, %v1702
      %v1704 = vlaneseq
      %v1705 = vshrl.u32 %v1704, 7
      %v1706 = vsub.s32 1, %v1705
      %v1707 = vrot.slane %v1657, %v1706
      %v1708 = vlaneseq
      %v1709 = vshrl.u32 %v1708, 7
      %v1710 = vsub.s32 1, %v1709
      %v1711 = vrot.slane %v1661, %v1710
      %v1712 = vlaneseq
      %v1713 = vshrl.u32 %v1712, 7
      %v1714 = vsub.s32 1, %v1713
      %v1715 = vrot.slane %v1665, %v1714
      %v1716 = vlaneseq
      %v1717 = vshrl.u32 %v1716, 7
      %v1718 = vsub.s32 1, %v1717
      %v1719 = vrot.slane %v1669, %v1718
      %v1720 = vlaneseq
      %v1721 = vshrl.u32 %v1720, 7
      %v1722 = vsub.s32 1, %v1721
      %v1723 = vrot.slane %v1673, %v1722
      %v1724 = vlaneseq
      %v1725 = vshrl.u32 %v1724, 7
      %v1726 = vsub.s32 1, %v1725
      %v1727 = vrot.slane %v1677, %v1726
      %v1728 = vlaneseq
      %v1729 = vshrl.u32 %v1728, 7
      %v1730 = vsub.s32 1, %v1729
      %v1731 = vrot.slane %v1681, %v1730
      %v1732 = vmul.f32 %v1362, %v1695
      %v1733 = vmul.f32 %v1364, %v1699
      %v1734 = vmul.f32 %v1405, %v1703
      %v1735 = vmul.f32 %v1407, %v1707
      %v1736 = vmul.f32 %v1448, %v1711
      %v1737 = vmul.f32 %v1450, %v1715
      %v1738 = vmul.f32 %v1491, %v1719
      %v1739 = vmul.f32 %v1493, %v1723
      %v1740 = vmul.f32 %v1534, %v1727
      %v1741 = vmul.f32 %v1536, %v1731
      %v1752 = vrot.slane %v1732, 3
      %v1753 = vrot.slane %v1733, 3
      %v1754 = vrot.slane %v1734, 3
      %v1755 = vrot.slane %v1735, 3
      %v1756 = vrot.slane %v1736, 3
      %v1757 = vrot.slane %v1737, 3
      %v1758 = vrot.slane %v1738, 3
      %v1759 = vrot.slane %v1739, 3
      %v1760 = vrot.slane %v1740, 3
      %v1761 = vrot.slane %v1741, 3
      %v1772 = vadd.f32 %v1632, %v1752
      %v1773 = vadd.f32 %v1633, %v1753
      %v1774 = vadd.f32 %v1634, %v1754
      %v1775 = vadd.f32 %v1635, %v1755
      %v1776 = vadd.f32 %v1636, %v1756
      %v1777 = vadd.f32 %v1637, %v1757
      %v1778 = vadd.f32 %v1638, %v1758
      %v1779 = vadd.f32 %v1639, %v1759
      %v1780 = vadd.f32 %v1640, %v1760
      %v1781 = vadd.f32 %v1641, %v1761
      %v1782 = vlaneseq
      %v1783 = vshrl.u32 %v1782, 7
      %v1784 = vsub.s32 2, %v1783
      %v1785 = vrot.slane %v175, %v1784
      %v1786 = vlaneseq
      %v1787 = vshrl.u32 %v1786, 7
      %v1788 = vsub.s32 6, %v1787
      %v1789 = vrot.slane %v175, %v1788
      %v1790 = vlaneseq
      %v1791 = vshrl.u32 %v1790, 7
      %v1792 = vsub.s32 2, %v1791
      %v1793 = vrot.slane %v176, %v1792
      %v1794 = vlaneseq
      %v1795 = vshrl.u32 %v1794, 7
      %v1796 = vsub.s32 6, %v1795
      %v1797 = vrot.slane %v176, %v1796
      %v1798 = vlaneseq
      %v1799 = vshrl.u32 %v1798, 7
      %v1800 = vsub.s32 2, %v1799
      %v1801 = vrot.slane %v177, %v1800
      %v1802 = vlaneseq
      %v1803 = vshrl.u32 %v1802, 7
      %v1804 = vsub.s32 6, %v1803
      %v1805 = vrot.slane %v177, %v1804
      %v1806 = vlaneseq
      %v1807 = vshrl.u32 %v1806, 7
      %v1808 = vsub.s32 2, %v1807
      %v1809 = vrot.slane %v178, %v1808
      %v1810 = vlaneseq
      %v1811 = vshrl.u32 %v1810, 7
      %v1812 = vsub.s32 6, %v1811
      %v1813 = vrot.slane %v178, %v1812
      %v1814 = vlaneseq
      %v1815 = vshrl.u32 %v1814, 7
      %v1816 = vsub.s32 2, %v1815
      %v1817 = vrot.slane %v179, %v1816
      %v1818 = vlaneseq
      %v1819 = vshrl.u32 %v1818, 7
      %v1820 = vsub.s32 6, %v1819
      %v1821 = vrot.slane %v179, %v1820
      %v1832 = vlaneseq
      %v1833 = vshrl.u32 %v1832, 7
      %v1834 = vsub.s32 2, %v1833
      %v1835 = vrot.slane %v1785, %v1834
      %v1836 = vlaneseq
      %v1837 = vshrl.u32 %v1836, 7
      %v1838 = vsub.s32 2, %v1837
      %v1839 = vrot.slane %v1789, %v1838
      %v1840 = vlaneseq
      %v1841 = vshrl.u32 %v1840, 7
      %v1842 = vsub.s32 2, %v1841
      %v1843 = vrot.slane %v1793, %v1842
      %v1844 = vlaneseq
      %v1845 = vshrl.u32 %v1844, 7
      %v1846 = vsub.s32 2, %v1845
      %v1847 = vrot.slane %v1797, %v1846
      %v1848 = vlaneseq
      %v1849 = vshrl.u32 %v1848, 7
      %v1850 = vsub.s32 2, %v1849
      %v1851 = vrot.slane %v1801, %v1850
      %v1852 = vlaneseq
      %v1853 = vshrl.u32 %v1852, 7
      %v1854 = vsub.s32 2, %v1853
      %v1855 = vrot.slane %v1805, %v1854
      %v1856 = vlaneseq
      %v1857 = vshrl.u32 %v1856, 7
      %v1858 = vsub.s32 2, %v1857
      %v1859 = vrot.slane %v1809, %v1858
      %v1860 = vlaneseq
      %v1861 = vshrl.u32 %v1860, 7
      %v1862 = vsub.s32 2, %v1861
      %v1863 = vrot.slane %v1813, %v1862
      %v1864 = vlaneseq
      %v1865 = vshrl.u32 %v1864, 7
      %v1866 = vsub.s32 2, %v1865
      %v1867 = vrot.slane %v1817, %v1866
      %v1868 = vlaneseq
      %v1869 = vshrl.u32 %v1868, 7
      %v1870 = vsub.s32 2, %v1869
      %v1871 = vrot.slane %v1821, %v1870
      %v1872 = vmul.f32 %v1362, %v1835
      %v1873 = vmul.f32 %v1364, %v1839
      %v1874 = vmul.f32 %v1405, %v1843
      %v1875 = vmul.f32 %v1407, %v1847
      %v1876 = vmul.f32 %v1448, %v1851
      %v1877 = vmul.f32 %v1450, %v1855
      %v1878 = vmul.f32 %v1491, %v1859
      %v1879 = vmul.f32 %v1493, %v1863
      %v1880 = vmul.f32 %v1534, %v1867
      %v1881 = vmul.f32 %v1536, %v1871
      %v1882 = vmul.f32 %v1366, %v1835
      %v1883 = vmul.f32 %v1368, %v1839
      %v1884 = vmul.f32 %v1409, %v1843
      %v1885 = vmul.f32 %v1411, %v1847
      %v1886 = vmul.f32 %v1452, %v1851
      %v1887 = vmul.f32 %v1454, %v1855
      %v1888 = vmul.f32 %v1495, %v1859
      %v1889 = vmul.f32 %v1497, %v1863
      %v1890 = vmul.f32 %v1538, %v1867
      %v1891 = vmul.f32 %v1540, %v1871
      %v1912 = vrot.slane %v1872, 6
      %v1913 = vrot.slane %v1882, 6
      %v1914 = vsel %vm1296, %v1912, %v1913
      %v1915 = vrot.slane %v1873, 6
      %v1916 = vrot.slane %v1883, 6
      %v1917 = vsel %vm1296, %v1915, %v1916
      %v1918 = vrot.slane %v1874, 6
      %v1919 = vrot.slane %v1884, 6
      %v1920 = vsel %vm1296, %v1918, %v1919
      %v1921 = vrot.slane %v1875, 6
      %v1922 = vrot.slane %v1885, 6
      %v1923 = vsel %vm1296, %v1921, %v1922
      %v1924 = vrot.slane %v1876, 6
      %v1925 = vrot.slane %v1886, 6
      %v1926 = vsel %vm1296, %v1924, %v1925
      %v1927 = vrot.slane %v1877, 6
      %v1928 = vrot.slane %v1887, 6
      %v1929 = vsel %vm1296, %v1927, %v1928
      %v1930 = vrot.slane %v1878, 6
      %v1931 = vrot.slane %v1888, 6
      %v1932 = vsel %vm1296, %v1930, %v1931
      %v1933 = vrot.slane %v1879, 6
      %v1934 = vrot.slane %v1889, 6
      %v1935 = vsel %vm1296, %v1933, %v1934
      %v1936 = vrot.slane %v1880, 6
      %v1937 = vrot.slane %v1890, 6
      %v1938 = vsel %vm1296, %v1936, %v1937
      %v1939 = vrot.slane %v1881, 6
      %v1940 = vrot.slane %v1891, 6
      %v1941 = vsel %vm1296, %v1939, %v1940
      %v1952 = vadd.f32 %v1772, %v1914
      %v1953 = vadd.f32 %v1773, %v1917
      %v1954 = vadd.f32 %v1774, %v1920
      %v1955 = vadd.f32 %v1775, %v1923
      %v1956 = vadd.f32 %v1776, %v1926
      %v1957 = vadd.f32 %v1777, %v1929
      %v1958 = vadd.f32 %v1778, %v1932
      %v1959 = vadd.f32 %v1779, %v1935
      %v1960 = vadd.f32 %v1780, %v1938
      %v1961 = vadd.f32 %v1781, %v1941
      %v1972 = vrot.slane %v1366, 1
      %v1973 = vrot.slane %v1368, 1
      %v1974 = vrot.slane %v1409, 1
      %v1975 = vrot.slane %v1411, 1
      %v1976 = vrot.slane %v1452, 1
      %v1977 = vrot.slane %v1454, 1
      %v1978 = vrot.slane %v1495, 1
      %v1979 = vrot.slane %v1497, 1
      %v1980 = vrot.slane %v1538, 1
      %v1981 = vrot.slane %v1540, 1
      %v1992 = vadd.f32 %v1952, %v1972
      %v1993 = vadd.f32 %v1953, %v1973
      %v1994 = vadd.f32 %v1954, %v1974
      %v1995 = vadd.f32 %v1955, %v1975
      %v1996 = vadd.f32 %v1956, %v1976
      %v1997 = vadd.f32 %v1957, %v1977
      %v1998 = vadd.f32 %v1958, %v1978
      %v1999 = vadd.f32 %v1959, %v1979
      %v2000 = vadd.f32 %v1960, %v1980
      %v2001 = vadd.f32 %v1961, %v1981
      %v2002 = vrcp.pop %v1366
      %v2003 = vrcp.pop %v1368
      %v2004 = vrcp.pop %v1409
      %v2005 = vrcp.pop %v1411
      %v2006 = vrcp.pop %v1452
      %v2007 = vrcp.pop %v1454
      %v2008 = vrcp.pop %v1495
      %v2009 = vrcp.pop %v1497
      %v2010 = vrcp.pop %v1538
      %v2011 = vrcp.pop %v1540
      %v2012 = vlaneseq
      %v2013 = vshrl.u32 %v2012, 7
      %v2014 = vsub.s32 4, %v2013
      %v2015 = vrot.slane %v2002, %v2014
      %v2016 = vlaneseq
      %v2017 = vshrl.u32 %v2016, 7
      %v2018 = vsub.s32 4, %v2017
      %v2019 = vrot.slane %v2003, %v2018
      %v2020 = vlaneseq
      %v2021 = vshrl.u32 %v2020, 7
      %v2022 = vsub.s32 4, %v2021
      %v2023 = vrot.slane %v2004, %v2022
      %v2024 = vlaneseq
      %v2025 = vshrl.u32 %v2024, 7
      %v2026 = vsub.s32 4, %v2025
      %v2027 = vrot.slane %v2005, %v2026
      %v2028 = vlaneseq
      %v2029 = vshrl.u32 %v2028, 7
      %v2030 = vsub.s32 4, %v2029
      %v2031 = vrot.slane %v2006, %v2030
      %v2032 = vlaneseq
      %v2033 = vshrl.u32 %v2032, 7
      %v2034 = vsub.s32 4, %v2033
      %v2035 = vrot.slane %v2007, %v2034
      %v2036 = vlaneseq
      %v2037 = vshrl.u32 %v2036, 7
      %v2038 = vsub.s32 4, %v2037
      %v2039 = vrot.slane %v2008, %v2038
      %v2040 = vlaneseq
      %v2041 = vshrl.u32 %v2040, 7
      %v2042 = vsub.s32 4, %v2041
      %v2043 = vrot.slane %v2009, %v2042
      %v2044 = vlaneseq
      %v2045 = vshrl.u32 %v2044, 7
      %v2046 = vsub.s32 4, %v2045
      %v2047 = vrot.slane %v2010, %v2046
      %v2048 = vlaneseq
      %v2049 = vshrl.u32 %v2048, 7
      %v2050 = vsub.s32 4, %v2049
      %v2051 = vrot.slane %v2011, %v2050
      %v2052 = vmul.f32 %v1992, %v2015
      %v2053 = vmul.f32 %v1993, %v2019
      %v2054 = vmul.f32 %v1994, %v2023
      %v2055 = vmul.f32 %v1995, %v2027
      %v2056 = vmul.f32 %v1996, %v2031
      %v2057 = vmul.f32 %v1997, %v2035
      %v2058 = vmul.f32 %v1998, %v2039
      %v2059 = vmul.f32 %v1999, %v2043
      %v2060 = vmul.f32 %v2000, %v2047
      %v2061 = vmul.f32 %v2001, %v2051
      %2062 = vst [vmem:[%s172] sm:$0x7] %v2052
      %2063 = vst [vmem:[%s172 + $0x8] sm:$0x7] %v2053
      %2064 = vst [vmem:[%s172 + $0x10] sm:$0x7] %v2054
      %2065 = vst [vmem:[%s172 + $0x18] sm:$0x7] %v2055
      %2066 = vst [vmem:[%s172 + $0x20] sm:$0x7] %v2056
      %2067 = vst [vmem:[%s172 + $0x28] sm:$0x7] %v2057
      %2068 = vst [vmem:[%s172 + $0x30] sm:$0x7] %v2058
      %2069 = vst [vmem:[%s172 + $0x38] sm:$0x7] %v2059
      %2070 = vst [vmem:[%s172 + $0x40] sm:$0x7] %v2060
      %2071 = vst [vmem:[%s172 + $0x48] sm:$0x7] %v2061
      %vm2072 = vcmp.ge.f32.partialorder %v2052, 0.0
      %vm2073 = vcmp.ge.f32.partialorder %v2053, 0.0
      %vm2074 = vcmp.ge.f32.partialorder %v2054, 0.0
      %vm2075 = vcmp.ge.f32.partialorder %v2055, 0.0
      %vm2076 = vcmp.ge.f32.partialorder %v2056, 0.0
      %vm2077 = vcmp.ge.f32.partialorder %v2057, 0.0
      %vm2078 = vcmp.ge.f32.partialorder %v2058, 0.0
      %vm2079 = vcmp.ge.f32.partialorder %v2059, 0.0
      %vm2080 = vcmp.ge.f32.partialorder %v2060, 0.0
      %vm2081 = vcmp.ge.f32.partialorder %v2061, 0.0
      %v2082 = vmax.f32 %v2052, 1e-06
      %v2083 = vmax.f32 %v2053, 1e-06
      %v2084 = vmax.f32 %v2054, 1e-06
      %v2085 = vmax.f32 %v2055, 1e-06
      %v2086 = vmax.f32 %v2056, 1e-06
      %v2087 = vmax.f32 %v2057, 1e-06
      %v2088 = vmax.f32 %v2058, 1e-06
      %v2089 = vmax.f32 %v2059, 1e-06
      %v2090 = vmax.f32 %v2060, 1e-06
      %v2091 = vmax.f32 %v2061, 1e-06
      %v2092 = vmin.f32 %v2052, -1e-06
      %v2093 = vmin.f32 %v2053, -1e-06
      %v2094 = vmin.f32 %v2054, -1e-06
      %v2095 = vmin.f32 %v2055, -1e-06
      %v2096 = vmin.f32 %v2056, -1e-06
      %v2097 = vmin.f32 %v2057, -1e-06
      %v2098 = vmin.f32 %v2058, -1e-06
      %v2099 = vmin.f32 %v2059, -1e-06
      %v2100 = vmin.f32 %v2060, -1e-06
      %v2101 = vmin.f32 %v2061, -1e-06
      %v2102 = vsel %vm2072, %v2082, %v2092
      %v2103 = vsel %vm2073, %v2083, %v2093
      %v2104 = vsel %vm2074, %v2084, %v2094
      %v2105 = vsel %vm2075, %v2085, %v2095
      %v2106 = vsel %vm2076, %v2086, %v2096
      %v2107 = vsel %vm2077, %v2087, %v2097
      %v2108 = vsel %vm2078, %v2088, %v2098
      %v2109 = vsel %vm2079, %v2089, %v2099
      %v2110 = vsel %vm2080, %v2090, %v2100
      %v2111 = vsel %vm2081, %v2091, %v2101
      %v2112 = vrcp.pop %v2102
      %v2113 = vrcp.pop %v2103
      %v2114 = vrcp.pop %v2104
      %v2115 = vrcp.pop %v2105
      %v2116 = vrcp.pop %v2106
      %v2117 = vrcp.pop %v2107
      %v2118 = vrcp.pop %v2108
      %v2119 = vrcp.pop %v2109
      %v2120 = vrcp.pop %v2110
      %v2121 = vrcp.pop %v2111
      %v2122 = vmul.f32 %v2112, 256.0
      %v2123 = vmul.f32 %v2113, 256.0
      %v2124 = vmul.f32 %v2114, 256.0
      %v2125 = vmul.f32 %v2115, 256.0
      %v2126 = vmul.f32 %v2116, 256.0
      %v2127 = vmul.f32 %v2117, 256.0
      %v2128 = vmul.f32 %v2118, 256.0
      %v2129 = vmul.f32 %v2119, 256.0
      %v2130 = vmul.f32 %v2120, 256.0
      %v2131 = vmul.f32 %v2121, 256.0
      %v2132 = vlaneseq
      %v2133 = vshrl.u32 %v2132, 7
      %v2134 = vsub.s32 2, %v2133
      %v2135 = vrot.slane %v2122, %v2134
      %v2136 = vlaneseq
      %v2137 = vshrl.u32 %v2136, 7
      %v2138 = vsub.s32 2, %v2137
      %v2139 = vrot.slane %v2123, %v2138
      %v2140 = vlaneseq
      %v2141 = vshrl.u32 %v2140, 7
      %v2142 = vsub.s32 2, %v2141
      %v2143 = vrot.slane %v2124, %v2142
      %v2144 = vlaneseq
      %v2145 = vshrl.u32 %v2144, 7
      %v2146 = vsub.s32 2, %v2145
      %v2147 = vrot.slane %v2125, %v2146
      %v2148 = vlaneseq
      %v2149 = vshrl.u32 %v2148, 7
      %v2150 = vsub.s32 2, %v2149
      %v2151 = vrot.slane %v2126, %v2150
      %v2152 = vlaneseq
      %v2153 = vshrl.u32 %v2152, 7
      %v2154 = vsub.s32 2, %v2153
      %v2155 = vrot.slane %v2127, %v2154
      %v2156 = vlaneseq
      %v2157 = vshrl.u32 %v2156, 7
      %v2158 = vsub.s32 2, %v2157
      %v2159 = vrot.slane %v2128, %v2158
      %v2160 = vlaneseq
      %v2161 = vshrl.u32 %v2160, 7
      %v2162 = vsub.s32 2, %v2161
      %v2163 = vrot.slane %v2129, %v2162
      %v2164 = vlaneseq
      %v2165 = vshrl.u32 %v2164, 7
      %v2166 = vsub.s32 2, %v2165
      %v2167 = vrot.slane %v2130, %v2166
      %v2168 = vlaneseq
      %v2169 = vshrl.u32 %v2168, 7
      %v2170 = vsub.s32 2, %v2169
      %v2171 = vrot.slane %v2131, %v2170
      %v2172 = vmul.f32 %v2052, %v2135
      %v2173 = vmul.f32 %v2053, %v2139
      %v2174 = vmul.f32 %v2054, %v2143
      %v2175 = vmul.f32 %v2055, %v2147
      %v2176 = vmul.f32 %v2056, %v2151
      %v2177 = vmul.f32 %v2057, %v2155
      %v2178 = vmul.f32 %v2058, %v2159
      %v2179 = vmul.f32 %v2059, %v2163
      %v2180 = vmul.f32 %v2060, %v2167
      %v2181 = vmul.f32 %v2061, %v2171
      %v2182 = vadd.f32 %v2172, 128.0
      %v2183 = vadd.f32 %v2173, 128.0
      %v2184 = vadd.f32 %v2174, 128.0
      %v2185 = vadd.f32 %v2175, 128.0
      %v2186 = vadd.f32 %v2176, 128.0
      %v2187 = vadd.f32 %v2177, 128.0
      %v2188 = vadd.f32 %v2178, 128.0
      %v2189 = vadd.f32 %v2179, 128.0
      %v2190 = vadd.f32 %v2180, 128.0
      %v2191 = vadd.f32 %v2181, 128.0
      %v2202 = vrot.slane %v2182, 5
      %v2203 = vrot.slane %v2183, 5
      %v2204 = vrot.slane %v2184, 5
      %v2205 = vrot.slane %v2185, 5
      %v2206 = vrot.slane %v2186, 5
      %v2207 = vrot.slane %v2187, 5
      %v2208 = vrot.slane %v2188, 5
      %v2209 = vrot.slane %v2189, 5
      %v2210 = vrot.slane %v2190, 5
      %v2211 = vrot.slane %v2191, 5
      %2222 = vst [vmem:[%s172] sm:$0x18] %v2202
      %2223 = vst [vmem:[%s172 + $0x8] sm:$0x18] %v2203
      %2224 = vst [vmem:[%s172 + $0x10] sm:$0x18] %v2204
      %2225 = vst [vmem:[%s172 + $0x18] sm:$0x18] %v2205
      %2226 = vst [vmem:[%s172 + $0x20] sm:$0x18] %v2206
      %2227 = vst [vmem:[%s172 + $0x28] sm:$0x18] %v2207
      %2228 = vst [vmem:[%s172 + $0x30] sm:$0x18] %v2208
      %2229 = vst [vmem:[%s172 + $0x38] sm:$0x18] %v2209
      %2230 = vst [vmem:[%s172 + $0x40] sm:$0x18] %v2210
      %2231 = vst [vmem:[%s172 + $0x48] sm:$0x18] %v2211
      %s2232 = smul.u32 10, %s14
      %p2233 = scmp.lt.s32.totalorder %s2232, 19
      %s2234 = scalar_select %p2233, %s2232, 19
      %s2235 = smul.addr %s2234, 8
      %s2236 = scalar_lea.vmem %s3, %s2235
      // Predicated region
      $region33: #{deform_forward.1} parent=31 // pred_check
        %p2237 = pneg %p100
      $region34: #{deform_forward.1} parent=31 // pred_check_branch
        %2239 = sbr.rel (%p2237) target = $region36
      $region35: #{deform_forward.1} parent=31 // pred_region
        %s2240 = smul.u32 10, %s14
      $region36: #{deform_forward.1} parent=31 // pred_fallthru
        _
    $region32: #{deform_forward.1} parent=5 // pred_fallthru
      _
    %p2241 = scmp.le.s32.totalorder 2, %s9
    // Predicated region
    $region37: #{deform_forward.1} parent=5 // pred_check
      %p2242 = pneg %p2241
    $region38: #{deform_forward.1} parent=5 // pred_check_branch
      %2244 = sbr.rel (%p2242) target = $region40
    $region39: #{deform_forward.1} parent=5 // pred_region
      %s2245 = ssub.s32 %s9, 2
      // Predicated region
      $region41: #{deform_forward.1} parent=39 // pred_check
        %p2246 = pneg %p106
      $region42: #{deform_forward.1} parent=39 // pred_check_branch
        %2248 = sbr.rel (%p2246) target = $region44
      $region43: #{deform_forward.1} parent=39 // pred_region
        %s2249 = smul.u32 10, %s15
        %p2250 = scmp.lt.s32.totalorder %s2249, 19
        %s2251 = scalar_select %p2250, %s2249, 19
        %s2252 = smul.addr %s2251, 8
        %s2253 = scalar_lea.vmem %s3, %s2252
      $region44: #{deform_forward.1} parent=39 // pred_fallthru
        _
    $region40: #{deform_forward.1} parent=5 // pred_fallthru
      _
  $region6: #{deform_forward.1} parent=0 // loop_footer
    %s13 = sadd.s32 1, %s9
  $region7: #{deform_forward.1} parent=0 // loop_footer_branch
    %8 = sbr.rel target = $region3
  $region8: #{deform_forward.1} parent=0 // loop_exit
    _

</llo_original>
